<compile_context>
chip_gen: v7x
topology: tpu7x:2x2x1
jax: 0.10.0
libtpu: 0.0.40
codegen_flags: <defaults>
</compile_context>

<pallas_src>
import jax
import jax.numpy as jnp
import numpy as np
from jax.experimental import pallas as pl
from jax.experimental.pallas import tpu as pltpu

K = 3  # kernel_size == stride for nn.MaxPool2d(kernel_size=3)


def _round_up(a, m):
    return (a + m - 1) // m * m


def _pool_kernel(x_ref, sel_ref, o_ref):
    # x_ref:   (bc, rows, W)      raw NCHW rows, planes on the leading axis, W on lanes
    # sel_ref: (W-2, W_out)       0/1 selection matrix, sel[3*w, w] == 1
    # o_ref:   (bc, th, W_out)    NCHW-native output block
    bc, th, w_out = o_ref.shape
    w = x_ref.shape[-1]
    sel = sel_ref[...]
    for r in range(th):  # static unroll (th is small: <= 128)
        # 3 window rows for output row r: contiguous ref slice, then VPU max.
        rows3 = x_ref[:, K * r:K * r + K, :]                                  # (bc, 3, W)
        v = jnp.maximum(jnp.maximum(rows3[:, 0], rows3[:, 1]), rows3[:, 2])   # (bc, W)
        # 3 window columns: unit-stride lane-shifted slices, VPU max.
        hm = jnp.maximum(jnp.maximum(v[:, 0:w - 2], v[:, 1:w - 1]), v[:, 2:w])  # (bc, W-2)
        # stride-3 column subsample: exact selection matmul (idle MXU).
        out_r = jnp.dot(hm.astype(jnp.float32), sel,
                        preferred_element_type=jnp.float32,
                        precision=jax.lax.Precision.HIGHEST)                  # (bc, W_out)
        o_ref[:, r, :] = out_r.astype(o_ref.dtype)


def maxpool2d_k3(x):
    """x: (N, C, H, W) -> (N, C, H//3, W//3), matching nn.MaxPool2d(3) (floor mode)."""
    N, C, H, W = x.shape
    assert H >= K and W >= K, "MaxPool2d(kernel_size=3) requires H >= 3 and W >= 3"
    H_out, W_out = H // K, W // K
    Ct = N * C
    itemsize = jnp.dtype(x.dtype).itemsize

    # Free leading-dim merge; no transpose, no crop (remainder rows/cols are never
    # selected for in-range outputs).
    x2 = x.reshape(Ct, H, W)

    # Column-subsample selection matrix (exact 0/1 picks of already-maxed columns).
    sel_np = np.zeros((W - 2, W_out), np.float32)
    sel_np[np.arange(W_out) * K, np.arange(W_out)] = 1.0
    sel = jnp.asarray(sel_np)

    # ---- generation-aware VMEM budget ------------------------------------------------
    try:
        vmem_cap = int(pltpu.get_tpu_info().vmem_capacity_bytes)
    except Exception:
        vmem_cap = 64 * 1024 * 1024  # conservative fallback (v7x per-TC VMEM)
    vmem_limit = min(vmem_cap * 3 // 4, 100 * 1024 * 1024)   # ~48 MiB on v7x, ~96 MiB on v5e/v6e
    sel_bytes = 2 * _round_up(W - 2, 8) * _round_up(W_out, 128) * 4
    budget = max(2 * 1024 * 1024, int(vmem_cap * 0.30) - sel_bytes)  # in+out, double-buffered

    # Honest per-plane tile accounting (lanes padded to 128, sublanes to 8).
    lane_in = _round_up(W, 128) * itemsize
    lane_out = _round_up(W_out, 128) * itemsize

    if H_out <= 8:
        th, rows = H_out, H              # full-H block (satisfies the (8,128) rule)
    else:
        th, rows = 8, K * 8              # 3*th = 24 rows, divisible by 8

    def pair_bytes(bc_, th_, rows_):
        return 2 * bc_ * (_round_up(rows_, 8) * lane_in + _round_up(th_, 8) * lane_out)

    bc = int(max(1, min(Ct, budget // max(1, pair_bytes(1, th, rows)))))
    if H_out > 8 and bc >= Ct:
        bc = Ct
        while (th + 8 <= H_out and th + 8 <= 128
               and pair_bytes(bc, th + 8, K * (th + 8)) <= budget):
            th += 8
            rows = K * th

    grid_c, grid_h = pl.cdiv(Ct, bc), pl.cdiv(H_out, th)
    if grid_c * grid_h == 1 and Ct >= 2:
        # Guarantee >= 2 parallel blocks so both v7x TensorCores get work.
        bc = (Ct + 1) // 2
        grid_c = pl.cdiv(Ct, bc)

    cost = pl.CostEstimate(
        flops=8 * Ct * H_out * W_out + 2 * Ct * H_out * (W - 2) * W_out,
        transcendentals=0,
        bytes_accessed=(Ct * H * W + Ct * H_out * W_out) * itemsize,
    )

    out = pl.pallas_call(
        _pool_kernel,
        out_shape=jax.ShapeDtypeStruct((Ct, H_out, W_out), x.dtype),
        grid_spec=pltpu.PrefetchScalarGridSpec(
            num_scalar_prefetch=0,
            grid=(grid_c, grid_h),
            in_specs=[
                pl.BlockSpec((bc, rows, W), lambda c, h: (c, h, 0)),
                pl.BlockSpec((W - 2, W_out), lambda c, h: (0, 0)),
            ],
            out_specs=pl.BlockSpec((bc, th, W_out), lambda c, h: (c, h, 0)),
        ),
        compiler_params=pltpu.CompilerParams(
            dimension_semantics=("parallel", "parallel"),
            vmem_limit_bytes=vmem_limit,
        ),
        cost_estimate=cost,
    )(x2, sel)

    return out.reshape(N, C, H_out, W_out)  # free


def _reference_maxpool(x):
    # XLA reference for verification only (not the kernel path).
    if jnp.issubdtype(x.dtype, jnp.floating):
        init = -jnp.inf
    else:
        init = jnp.iinfo(x.dtype).min
    return jax.lax.reduce_window(
        x, init, jax.lax.max,
        window_dimensions=(1, 1, K, K),
        window_strides=(1, 1, K, K),
        padding="VALID",
    )


if __name__ == "__main__":
    key = jax.random.PRNGKey(0)
    k1, k2 = jax.random.split(key)

    # Small case (matches the module spec's typical input): exercises the full-H
    # path, W remainder (16 -> 15 used), and a 2-block channel grid.
    x1 = jax.random.normal(k1, (2, 4, 16, 16), dtype=jnp.float32)
    y1 = jax.block_until_ready(maxpool2d_k3(x1))
    r1 = jax.block_until_ready(_reference_maxpool(x1))
    assert y1.shape == (2, 4, 5, 5), y1.shape
    assert np.allclose(np.asarray(y1), np.asarray(r1), atol=1e-6), "mismatch vs reference (case 1)"

    # Larger case: N*C == 128, blocked-row path with a remainder row block
    # (H_out=9, th=8), plus H and W remainders.
    x2 = jax.random.normal(k2, (2, 64, 29, 28), dtype=jnp.float32)
    y2 = jax.block_until_ready(maxpool2d_k3(x2))
    r2 = jax.block_until_ready(_reference_maxpool(x2))
    assert y2.shape == (2, 64, 9, 9), y2.shape
    assert np.allclose(np.asarray(y2), np.asarray(r2), atol=1e-6), "mismatch vs reference (case 2)"

    print("KERNEL_OK")
</pallas_src>

<mosaic_0001>
module attributes {stable_mosaic.version = 11 : i64} {
  func.func @_pool_kernel(%arg0: i32, %arg1: i32, %arg2: memref<4x16x16xf32, #tpu.memory_space<vmem>>, %arg3: memref<14x5xf32, #tpu.memory_space<vmem>>, %arg4: memref<4x5x5xf32, #tpu.memory_space<vmem>>) attributes {dimension_semantics = [#tpu.dimension_semantics<parallel>, #tpu.dimension_semantics<parallel>], iteration_bounds = array<i64: 2, 1>, scalar_prefetch = 0 : i64, scratch_operands = 0 : i64, tpu.core_type = #tpu.core_type<tc>, window_params = [{transform_indices = @transform_0, window_bounds = array<i64: 4, 16, 16>}, {pipeline_mode = #tpu.pipeline_mode<synchronous>, transform_indices = @transform_1, window_bounds = array<i64: 14, 5>}, {transform_indices = @transform_2, window_bounds = array<i64: 4, 5, 5>}]} {
    %c0 = arith.constant 0 : index
    %c0_0 = arith.constant 0 : index
    %0 = vector.load %arg3[%c0, %c0_0] : memref<14x5xf32, #tpu.memory_space<vmem>>, vector<14x5xf32>
    %c0_1 = arith.constant 0 : index
    %c0_2 = arith.constant 0 : index
    %c0_3 = arith.constant 0 : index
    %1 = vector.load %arg2[%c0_1, %c0_2, %c0_3] : memref<4x16x16xf32, #tpu.memory_space<vmem>>, vector<4x3x16xf32>
    %2 = vector.extract_strided_slice %1 {offsets = [0, 0, 0], sizes = [4, 1, 16], strides = [1, 1, 1]} : vector<4x3x16xf32> to vector<4x1x16xf32>
    %3 = vector.shape_cast %2 : vector<4x1x16xf32> to vector<4x16xf32>
    %4 = vector.extract_strided_slice %1 {offsets = [0, 1, 0], sizes = [4, 1, 16], strides = [1, 1, 1]} : vector<4x3x16xf32> to vector<4x1x16xf32>
    %5 = vector.shape_cast %4 : vector<4x1x16xf32> to vector<4x16xf32>
    %6 = arith.maximumf %3, %5 : vector<4x16xf32>
    %7 = vector.extract_strided_slice %1 {offsets = [0, 2, 0], sizes = [4, 1, 16], strides = [1, 1, 1]} : vector<4x3x16xf32> to vector<4x1x16xf32>
    %8 = vector.shape_cast %7 : vector<4x1x16xf32> to vector<4x16xf32>
    %9 = arith.maximumf %6, %8 : vector<4x16xf32>
    %10 = vector.extract_strided_slice %9 {offsets = [0, 0], sizes = [4, 14], strides = [1, 1]} : vector<4x16xf32> to vector<4x14xf32>
    %11 = vector.extract_strided_slice %9 {offsets = [0, 1], sizes = [4, 14], strides = [1, 1]} : vector<4x16xf32> to vector<4x14xf32>
    %12 = arith.maximumf %10, %11 : vector<4x14xf32>
    %13 = vector.extract_strided_slice %9 {offsets = [0, 2], sizes = [4, 14], strides = [1, 1]} : vector<4x16xf32> to vector<4x14xf32>
    %14 = arith.maximumf %12, %13 : vector<4x14xf32>
    %cst = arith.constant dense<0.000000e+00> : vector<4x5xf32>
    %15 = tpu.matmul %14, %0, %cst {dimension_numbers = #tpu.dot_dimension_numbers<[1], [0], [0], [1], [0, 0, 1, 1], [], []>, precision = #tpu.contract_precision<fp32>} : vector<4x14xf32>, vector<14x5xf32>, vector<4x5xf32> -> vector<4x5xf32>
    %c0_4 = arith.constant 0 : index
    %c0_5 = arith.constant 0 : index
    %c0_6 = arith.constant 0 : index
    %16 = vector.load %arg4[%c0_4, %c0_5, %c0_6] : memref<4x5x5xf32, #tpu.memory_space<vmem>>, vector<4x1x5xf32>
    %17 = vector.shape_cast %16 : vector<4x1x5xf32> to vector<4x5xf32>
    %18 = vector.shape_cast %15 : vector<4x5xf32> to vector<4x1x5xf32>
    tpu.vector_store %arg4[%c0_4, %c0_5, %c0_6], %18 {strides = array<i32>} : memref<4x5x5xf32, #tpu.memory_space<vmem>>, vector<4x1x5xf32>,
    %c0_7 = arith.constant 0 : index
    %c3 = arith.constant 3 : index
    %c0_8 = arith.constant 0 : index
    %19 = vector.load %arg2[%c0_7, %c3, %c0_8] : memref<4x16x16xf32, #tpu.memory_space<vmem>>, vector<4x3x16xf32>
    %20 = vector.extract_strided_slice %19 {offsets = [0, 0, 0], sizes = [4, 1, 16], strides = [1, 1, 1]} : vector<4x3x16xf32> to vector<4x1x16xf32>
    %21 = vector.shape_cast %20 : vector<4x1x16xf32> to vector<4x16xf32>
    %22 = vector.extract_strided_slice %19 {offsets = [0, 1, 0], sizes = [4, 1, 16], strides = [1, 1, 1]} : vector<4x3x16xf32> to vector<4x1x16xf32>
    %23 = vector.shape_cast %22 : vector<4x1x16xf32> to vector<4x16xf32>
    %24 = arith.maximumf %21, %23 : vector<4x16xf32>
    %25 = vector.extract_strided_slice %19 {offsets = [0, 2, 0], sizes = [4, 1, 16], strides = [1, 1, 1]} : vector<4x3x16xf32> to vector<4x1x16xf32>
    %26 = vector.shape_cast %25 : vector<4x1x16xf32> to vector<4x16xf32>
    %27 = arith.maximumf %24, %26 : vector<4x16xf32>
    %28 = vector.extract_strided_slice %27 {offsets = [0, 0], sizes = [4, 14], strides = [1, 1]} : vector<4x16xf32> to vector<4x14xf32>
    %29 = vector.extract_strided_slice %27 {offsets = [0, 1], sizes = [4, 14], strides = [1, 1]} : vector<4x16xf32> to vector<4x14xf32>
    %30 = arith.maximumf %28, %29 : vector<4x14xf32>
    %31 = vector.extract_strided_slice %27 {offsets = [0, 2], sizes = [4, 14], strides = [1, 1]} : vector<4x16xf32> to vector<4x14xf32>
    %32 = arith.maximumf %30, %31 : vector<4x14xf32>
    %cst_9 = arith.constant dense<0.000000e+00> : vector<4x5xf32>
    %33 = tpu.matmul %32, %0, %cst_9 {dimension_numbers = #tpu.dot_dimension_numbers<[1], [0], [0], [1], [0, 0, 1, 1], [], []>, precision = #tpu.contract_precision<fp32>} : vector<4x14xf32>, vector<14x5xf32>, vector<4x5xf32> -> vector<4x5xf32>
    %c0_10 = arith.constant 0 : index
    %c1 = arith.constant 1 : index
    %c0_11 = arith.constant 0 : index
    %34 = vector.load %arg4[%c0_10, %c1, %c0_11] : memref<4x5x5xf32, #tpu.memory_space<vmem>>, vector<4x1x5xf32>
    %35 = vector.shape_cast %34 : vector<4x1x5xf32> to vector<4x5xf32>
    %36 = vector.shape_cast %33 : vector<4x5xf32> to vector<4x1x5xf32>
    tpu.vector_store %arg4[%c0_10, %c1, %c0_11], %36 {strides = array<i32>} : memref<4x5x5xf32, #tpu.memory_space<vmem>>, vector<4x1x5xf32>,
    %c0_12 = arith.constant 0 : index
    %c6 = arith.constant 6 : index
    %c0_13 = arith.constant 0 : index
    %37 = vector.load %arg2[%c0_12, %c6, %c0_13] : memref<4x16x16xf32, #tpu.memory_space<vmem>>, vector<4x3x16xf32>
    %38 = vector.extract_strided_slice %37 {offsets = [0, 0, 0], sizes = [4, 1, 16], strides = [1, 1, 1]} : vector<4x3x16xf32> to vector<4x1x16xf32>
    %39 = vector.shape_cast %38 : vector<4x1x16xf32> to vector<4x16xf32>
    %40 = vector.extract_strided_slice %37 {offsets = [0, 1, 0], sizes = [4, 1, 16], strides = [1, 1, 1]} : vector<4x3x16xf32> to vector<4x1x16xf32>
    %41 = vector.shape_cast %40 : vector<4x1x16xf32> to vector<4x16xf32>
    %42 = arith.maximumf %39, %41 : vector<4x16xf32>
    %43 = vector.extract_strided_slice %37 {offsets = [0, 2, 0], sizes = [4, 1, 16], strides = [1, 1, 1]} : vector<4x3x16xf32> to vector<4x1x16xf32>
    %44 = vector.shape_cast %43 : vector<4x1x16xf32> to vector<4x16xf32>
    %45 = arith.maximumf %42, %44 : vector<4x16xf32>
    %46 = vector.extract_strided_slice %45 {offsets = [0, 0], sizes = [4, 14], strides = [1, 1]} : vector<4x16xf32> to vector<4x14xf32>
    %47 = vector.extract_strided_slice %45 {offsets = [0, 1], sizes = [4, 14], strides = [1, 1]} : vector<4x16xf32> to vector<4x14xf32>
    %48 = arith.maximumf %46, %47 : vector<4x14xf32>
    %49 = vector.extract_strided_slice %45 {offsets = [0, 2], sizes = [4, 14], strides = [1, 1]} : vector<4x16xf32> to vector<4x14xf32>
    %50 = arith.maximumf %48, %49 : vector<4x14xf32>
    %cst_14 = arith.constant dense<0.000000e+00> : vector<4x5xf32>
    %51 = tpu.matmul %50, %0, %cst_14 {dimension_numbers = #tpu.dot_dimension_numbers<[1], [0], [0], [1], [0, 0, 1, 1], [], []>, precision = #tpu.contract_precision<fp32>} : vector<4x14xf32>, vector<14x5xf32>, vector<4x5xf32> -> vector<4x5xf32>
    %c0_15 = arith.constant 0 : index
    %c2 = arith.constant 2 : index
    %c0_16 = arith.constant 0 : index
    %52 = vector.load %arg4[%c0_15, %c2, %c0_16] : memref<4x5x5xf32, #tpu.memory_space<vmem>>, vector<4x1x5xf32>
    %53 = vector.shape_cast %52 : vector<4x1x5xf32> to vector<4x5xf32>
    %54 = vector.shape_cast %51 : vector<4x5xf32> to vector<4x1x5xf32>
    tpu.vector_store %arg4[%c0_15, %c2, %c0_16], %54 {strides = array<i32>} : memref<4x5x5xf32, #tpu.memory_space<vmem>>, vector<4x1x5xf32>,
    %c0_17 = arith.constant 0 : index
    %c9 = arith.constant 9 : index
    %c0_18 = arith.constant 0 : index
    %55 = vector.load %arg2[%c0_17, %c9, %c0_18] : memref<4x16x16xf32, #tpu.memory_space<vmem>>, vector<4x3x16xf32>
    %56 = vector.extract_strided_slice %55 {offsets = [0, 0, 0], sizes = [4, 1, 16], strides = [1, 1, 1]} : vector<4x3x16xf32> to vector<4x1x16xf32>
    %57 = vector.shape_cast %56 : vector<4x1x16xf32> to vector<4x16xf32>
    %58 = vector.extract_strided_slice %55 {offsets = [0, 1, 0], sizes = [4, 1, 16], strides = [1, 1, 1]} : vector<4x3x16xf32> to vector<4x1x16xf32>
    %59 = vector.shape_cast %58 : vector<4x1x16xf32> to vector<4x16xf32>
    %60 = arith.maximumf %57, %59 : vector<4x16xf32>
    %61 = vector.extract_strided_slice %55 {offsets = [0, 2, 0], sizes = [4, 1, 16], strides = [1, 1, 1]} : vector<4x3x16xf32> to vector<4x1x16xf32>
    %62 = vector.shape_cast %61 : vector<4x1x16xf32> to vector<4x16xf32>
    %63 = arith.maximumf %60, %62 : vector<4x16xf32>
    %64 = vector.extract_strided_slice %63 {offsets = [0, 0], sizes = [4, 14], strides = [1, 1]} : vector<4x16xf32> to vector<4x14xf32>
    %65 = vector.extract_strided_slice %63 {offsets = [0, 1], sizes = [4, 14], strides = [1, 1]} : vector<4x16xf32> to vector<4x14xf32>
    %66 = arith.maximumf %64, %65 : vector<4x14xf32>
    %67 = vector.extract_strided_slice %63 {offsets = [0, 2], sizes = [4, 14], strides = [1, 1]} : vector<4x16xf32> to vector<4x14xf32>
    %68 = arith.maximumf %66, %67 : vector<4x14xf32>
    %cst_19 = arith.constant dense<0.000000e+00> : vector<4x5xf32>
    %69 = tpu.matmul %68, %0, %cst_19 {dimension_numbers = #tpu.dot_dimension_numbers<[1], [0], [0], [1], [0, 0, 1, 1], [], []>, precision = #tpu.contract_precision<fp32>} : vector<4x14xf32>, vector<14x5xf32>, vector<4x5xf32> -> vector<4x5xf32>
    %c0_20 = arith.constant 0 : index
    %c3_21 = arith.constant 3 : index
    %c0_22 = arith.constant 0 : index
    %70 = vector.load %arg4[%c0_20, %c3_21, %c0_22] : memref<4x5x5xf32, #tpu.memory_space<vmem>>, vector<4x1x5xf32>
    %71 = vector.shape_cast %70 : vector<4x1x5xf32> to vector<4x5xf32>
    %72 = vector.shape_cast %69 : vector<4x5xf32> to vector<4x1x5xf32>
    tpu.vector_store %arg4[%c0_20, %c3_21, %c0_22], %72 {strides = array<i32>} : memref<4x5x5xf32, #tpu.memory_space<vmem>>, vector<4x1x5xf32>,
    %c0_23 = arith.constant 0 : index
    %c12 = arith.constant 12 : index
    %c0_24 = arith.constant 0 : index
    %73 = vector.load %arg2[%c0_23, %c12, %c0_24] : memref<4x16x16xf32, #tpu.memory_space<vmem>>, vector<4x3x16xf32>
    %74 = vector.extract_strided_slice %73 {offsets = [0, 0, 0], sizes = [4, 1, 16], strides = [1, 1, 1]} : vector<4x3x16xf32> to vector<4x1x16xf32>
    %75 = vector.shape_cast %74 : vector<4x1x16xf32> to vector<4x16xf32>
    %76 = vector.extract_strided_slice %73 {offsets = [0, 1, 0], sizes = [4, 1, 16], strides = [1, 1, 1]} : vector<4x3x16xf32> to vector<4x1x16xf32>
    %77 = vector.shape_cast %76 : vector<4x1x16xf32> to vector<4x16xf32>
    %78 = arith.maximumf %75, %77 : vector<4x16xf32>
    %79 = vector.extract_strided_slice %73 {offsets = [0, 2, 0], sizes = [4, 1, 16], strides = [1, 1, 1]} : vector<4x3x16xf32> to vector<4x1x16xf32>
    %80 = vector.shape_cast %79 : vector<4x1x16xf32> to vector<4x16xf32>
    %81 = arith.maximumf %78, %80 : vector<4x16xf32>
    %82 = vector.extract_strided_slice %81 {offsets = [0, 0], sizes = [4, 14], strides = [1, 1]} : vector<4x16xf32> to vector<4x14xf32>
    %83 = vector.extract_strided_slice %81 {offsets = [0, 1], sizes = [4, 14], strides = [1, 1]} : vector<4x16xf32> to vector<4x14xf32>
    %84 = arith.maximumf %82, %83 : vector<4x14xf32>
    %85 = vector.extract_strided_slice %81 {offsets = [0, 2], sizes = [4, 14], strides = [1, 1]} : vector<4x16xf32> to vector<4x14xf32>
    %86 = arith.maximumf %84, %85 : vector<4x14xf32>
    %cst_25 = arith.constant dense<0.000000e+00> : vector<4x5xf32>
    %87 = tpu.matmul %86, %0, %cst_25 {dimension_numbers = #tpu.dot_dimension_numbers<[1], [0], [0], [1], [0, 0, 1, 1], [], []>, precision = #tpu.contract_precision<fp32>} : vector<4x14xf32>, vector<14x5xf32>, vector<4x5xf32> -> vector<4x5xf32>
    %c0_26 = arith.constant 0 : index
    %c4 = arith.constant 4 : index
    %c0_27 = arith.constant 0 : index
    %88 = vector.load %arg4[%c0_26, %c4, %c0_27] : memref<4x5x5xf32, #tpu.memory_space<vmem>>, vector<4x1x5xf32>
    %89 = vector.shape_cast %88 : vector<4x1x5xf32> to vector<4x5xf32>
    %90 = vector.shape_cast %87 : vector<4x5xf32> to vector<4x1x5xf32>
    tpu.vector_store %arg4[%c0_26, %c4, %c0_27], %90 {strides = array<i32>} : memref<4x5x5xf32, #tpu.memory_space<vmem>>, vector<4x1x5xf32>,
    return
  }
  func.func @transform_0(%arg0: i32, %arg1: i32) -> (i32, i32, i32) {
    %c0_i32 = arith.constant 0 : i32
    %c0_i32_0 = arith.constant 0 : i32
    return %arg0, %arg1, %c0_i32 : i32, i32, i32
  }
  func.func @transform_1(%arg0: i32, %arg1: i32) -> (i32, i32) {
    %c0_i32 = arith.constant 0 : i32
    %c0_i32_0 = arith.constant 0 : i32
    %c0_i32_1 = arith.constant 0 : i32
    return %c0_i32, %c0_i32_0 : i32, i32
  }
  func.func @transform_2(%arg0: i32, %arg1: i32) -> (i32, i32, i32) {
    %c0_i32 = arith.constant 0 : i32
    %c0_i32_0 = arith.constant 0 : i32
    return %arg0, %arg1, %c0_i32 : i32, i32, i32
  }
}

</mosaic_0001>

<llo_original>
// kernel: tpu_custom_call.1
$region0: #{tpu_custom_call.1}
  #allocation0 [shape = 'u32[]', space=smem, size = 0x4, offset = 0x4, fixed_abs, tag = 'smem constant byte address 0x4 - core index']
  #allocation1 [shape = 'u32[144,128]{1,0:T(1,128)}', space=vmem, size = 0x12000, scoped, tag = 'internal scratch']
  %s0 = inlined_call_operand.hbm [shape: f32[8,16,16], index: 0, kind: input, shape index: {}]
  %s1 = inlined_call_operand.vmem [shape: f32[14,5], index: 1, kind: input, shape index: {}]
  %s2 = inlined_call_operand.vmem [shape: f32[8,5,5], index: 2, kind: output, shape index: {}]
  %s3 = sld [smem:[#allocation0]]
  $region45: #{tpu_custom_call.1} parent=0
    _
  %s5 = ssub.s32 1, %s3
  %s6 = scalar_select 0, %s5, %s3
  $region1: #{tpu_custom_call.1} parent=0
    #allocation2 [shape = 'u8[65536]{0}', space=vmem, size = 0x10000, scoped, tag = 'input window, operand 0']
    #allocation3 [shape = 's32[2]{0}', space=sflag, size = 0x8, scoped, tag = 'scoped memory for tpu_custom_call.1']
    %7 = vsyncpa [#allocation3], 0
    %s8 = scalar_lea.sflag [#allocation3], 1
    %9 = vsyncpa %s8, 0
    loop: start=0, step=1, limit=4
    $region2: #{tpu_custom_call.1} parent=1 // loop_pre_header
      _
    $region3: #{tpu_custom_call.1} parent=1 // loop_header
      %s11 = sphi 0, %s15
      %p12 = scmp.ge.s32.totalorder %s11, 4
      %s18 = sphi 0, %s30
      %s19 = sphi 0, %s26
      %s20 = sphi 0, %s18
      %s21 = sphi 0, %s19
      %s22 = sphi 0, %s20
      %s23 = sphi 0, %s21
      %s35 = sphi 0, %s37
      %s38 = sphi 0, %s35
      %s39 = sphi 0, %s38
      %s55 = sphi 0, %s39
      %s59 = sphi 0, %s59
      %s61 = sphi 0, %s59
      %s62 = sphi 0, %s61
      %s76 = sphi 0, %s62
      %s84 = sphi 0, %s86
      %s87 = sphi 0, %s84
      %s88 = sphi 0, %s87
      %s104 = sphi 0, %s88
    $region4: #{tpu_custom_call.1} parent=1 // loop_header_branch
      %14 = sbr.rel (%p12) target = $region8
    $region5: #{tpu_custom_call.1} parent=1 // loop_body
      %s16 = ssub.s32 %s11, 1
      %s17 = ssub.s32 %s11, 2
      %s24 = sadd.s32 1, %s19
      %p25 = scmp.ge.s32.totalorder %s24, 1
      %s26 = scalar_select %p25, 0, %s24
      %s27 = sadd.s32 1, %s18
      %s28 = scalar_select %p25, %s27, %s18
      %p29 = scmp.ge.s32.totalorder %s28, 2
      %s30 = scalar_select %p29, 0, %s28
      %s31 = ssub.s32 %s18, %s30
      %s32 = ssub.s32 %s19, %s26
      %s33 = sor.u32 %s31, %s32
      %p34 = scmp.eq.s32.totalorder %s33, 0
      %s36 = sadd.s32 %s35, 1
      %s37 = scalar_select %p34, %s35, %s36
      %p40 = pneg %p34
      %p41 = scmp.eq.s32.totalorder %s11, 1
      %p42 = por %p40, %p41
      %p43 = scmp.ne.s32.totalorder %s35, %s38
      %p44 = scmp.eq.s32.totalorder %s11, 0
      %p45 = por %p43, %p44
      %p46 = scmp.ne.s32.totalorder %s35, %s38
      %p47 = scmp.eq.s32.totalorder %s16, 1
      %p48 = por %p46, %p47
      %p49 = scmp.ne.s32.totalorder %s38, %s39
      %p50 = scmp.eq.s32.totalorder %s16, 0
      %p51 = por %p49, %p50
      %p52 = scmp.ne.s32.totalorder %s38, %s39
      %p53 = scmp.eq.s32.totalorder %s17, 1
      %p54 = por %p52, %p53
      %p56 = scmp.ne.s32.totalorder %s39, %s55
      %p57 = scmp.eq.s32.totalorder %s17, 0
      %p58 = por %p56, %p57
      %s60 = sadd.s32 %s59, 1
      %p63 = scmp.eq.s32.totalorder %s11, 1
      %p64 = scmp.ne.s32.totalorder %s59, %s61
      %p65 = scmp.eq.s32.totalorder %s11, 0
      %p66 = por %p64, %p65
      %p67 = scmp.ne.s32.totalorder %s59, %s61
      %p68 = scmp.eq.s32.totalorder %s16, 1
      %p69 = por %p67, %p68
      %p70 = scmp.ne.s32.totalorder %s61, %s62
      %p71 = scmp.eq.s32.totalorder %s16, 0
      %p72 = por %p70, %p71
      %p73 = scmp.ne.s32.totalorder %s61, %s62
      %p74 = scmp.eq.s32.totalorder %s17, 1
      %p75 = por %p73, %p74
      %p77 = scmp.ne.s32.totalorder %s62, %s76
      %p78 = scmp.eq.s32.totalorder %s17, 0
      %p79 = por %p77, %p78
      %s80 = ssub.s32 %s18, %s30
      %s81 = ssub.s32 %s19, %s26
      %s82 = sor.u32 %s80, %s81
      %p83 = scmp.eq.s32.totalorder %s82, 0
      %s85 = sadd.s32 %s84, 1
      %s86 = scalar_select %p83, %s84, %s85
      %p89 = pneg %p83
      %p90 = scmp.eq.s32.totalorder %s11, 1
      %p91 = por %p89, %p90
      %p92 = scmp.ne.s32.totalorder %s84, %s87
      %p93 = scmp.eq.s32.totalorder %s11, 0
      %p94 = por %p92, %p93
      %p95 = scmp.ne.s32.totalorder %s84, %s87
      %p96 = scmp.eq.s32.totalorder %s16, 1
      %p97 = por %p95, %p96
      %p98 = scmp.ne.s32.totalorder %s87, %s88
      %p99 = scmp.eq.s32.totalorder %s16, 0
      %p100 = por %p98, %p99
      %p101 = scmp.ne.s32.totalorder %s87, %s88
      %p102 = scmp.eq.s32.totalorder %s17, 1
      %p103 = por %p101, %p102
      %p105 = scmp.ne.s32.totalorder %s88, %s104
      %p106 = scmp.eq.s32.totalorder %s17, 0
      %p107 = por %p105, %p106
      %p108 = scmp.le.s32.totalorder 1, %s11
      %p109 = scmp.lt.s32.totalorder %s11, 3
      %p110 = pnand %p108, %p109
      %p111 = pneg %p110
      // Predicated region
      $region9: #{tpu_custom_call.1} parent=5 // pred_check
        _
      $region10: #{tpu_custom_call.1} parent=5 // pred_check_branch
        %113 = sbr.rel (%p110) target = $region12
      $region11: #{tpu_custom_call.1} parent=5 // pred_region
        %s114 = ssub.s32 %s11, 1
        // Predicated region
        $region13: #{tpu_custom_call.1} parent=11 // pred_check
          %p115 = pneg %p72
        $region14: #{tpu_custom_call.1} parent=11 // pred_check_branch
          %117 = sbr.rel (%p115) target = $region16
        $region15: #{tpu_custom_call.1} parent=11 // pred_region
          _
        $region16: #{tpu_custom_call.1} parent=11 // pred_fallthru
          _
      $region12: #{tpu_custom_call.1} parent=5 // pred_fallthru
        _
      %p118 = scmp.lt.s32.totalorder %s11, 2
      // Predicated region
      $region17: #{tpu_custom_call.1} parent=5 // pred_check
        %p119 = pneg %p118
      $region18: #{tpu_custom_call.1} parent=5 // pred_check_branch
        %121 = sbr.rel (%p119) target = $region20
      $region19: #{tpu_custom_call.1} parent=5 // pred_region
        // Predicated region
        $region21: #{tpu_custom_call.1} parent=19 // pred_check
          %p122 = pneg %p45
        $region22: #{tpu_custom_call.1} parent=19 // pred_check_branch
          %124 = sbr.rel (%p122) target = $region24
        $region23: #{tpu_custom_call.1} parent=19 // pred_region
          %s125 = sand.u32 %s35, 1
          %s126 = scalar_lea.sflag [#allocation3], %s125
          %s127 = sand.u32 %s35, 1
          %s128 = smul.addr %s127, 64
          %s129 = scalar_lea.vmem [#allocation2], %s128
          %s130 = smul.u32 4, %s18
          %s131 = smul.u32 2, %s19
          %s133 = ssub.s32 1024, 1024
          %134 = vsyncadd %s126, %s133
          %s135 = smul.addr %s130, 2
          %s136 = sadd.s32 %s131, %s135
          %s137 = smul.addr %s136, 128
          %s138 = scalar_lea.hbm %s0, %s137
          %s139 = sshll.u32 %s129, 4
          %s140 = int_to_ptr.vmem [resolvable:$true] %s139
          %145 = dma.hbm_to_vmem [thread:$0]  %s138, 1024, %s140, %s126, 128, 128, 8
        $region24: #{tpu_custom_call.1} parent=19 // pred_fallthru
          _
      $region20: #{tpu_custom_call.1} parent=5 // pred_fallthru
        _
      %p146 = scmp.le.s32.totalorder 1, %s11
      %p147 = scmp.lt.s32.totalorder %s11, 3
      %p148 = pnand %p146, %p147
      %p149 = pneg %p148
      // Predicated region
      $region25: #{tpu_custom_call.1} parent=5 // pred_check
        _
      $region26: #{tpu_custom_call.1} parent=5 // pred_check_branch
        %151 = sbr.rel (%p148) target = $region28
      $region27: #{tpu_custom_call.1} parent=5 // pred_region
        %s152 = ssub.s32 %s11, 1
        %s153 = sand.u32 %s38, 1
        %s154 = scalar_lea.sflag [#allocation3], %s153
        %s155 = sand.u32 %s38, 1
        %s156 = smul.addr %s155, 64
        %s157 = scalar_lea.vmem [#allocation2], %s156
        // Predicated region
        $region29: #{tpu_custom_call.1} parent=27 // pred_check
          %p158 = pneg %p51
        $region30: #{tpu_custom_call.1} parent=27 // pred_check_branch
          %160 = sbr.rel (%p158) target = $region32
        $region31: #{tpu_custom_call.1} parent=27 // pred_region
          %161 = dma.done %s154, 1024
        $region32: #{tpu_custom_call.1} parent=27 // pred_fallthru
          _
        %s162 = sand.u32 %s38, 1
        %s163 = scalar_lea.sflag [#allocation3], %s162
        %s164 = sand.u32 %s38, 1
        %s165 = smul.addr %s164, 64
        %s166 = scalar_lea.vmem [#allocation2], %s165
        %p167 = pneg %p51
        %p168 = pneg %p48
        %p169 = pneg %p72
        %p170 = pneg %p69
        %p171 = pneg %p100
        %p172 = pneg %p97
        %s173 = smul.u32 4, %s20
        %p174 = scmp.lt.s32.totalorder %s173, 7
        %s175 = scalar_select %p174, %s173, 7
        %p176 = scmp.lt.s32.totalorder %s21, 0
        %s177 = scalar_select %p176, %s21, 0
        %s178 = sadd.s32 %s177, %s175
        %s179 = smul.addr %s178, 8
        %s180 = scalar_lea.vmem %s2, %s179
        %s181 = smul.u32 4, %s20
        %s182 = smul.u32 2, %s21
        %s183 = smul.u32 4, %s20
        %p184 = scmp.lt.s32.totalorder %s183, 7
        %s185 = scalar_select %p184, %s183, 7
        %p186 = scmp.lt.s32.totalorder %s21, 0
        %s187 = scalar_select %p186, %s21, 0
        %s188 = sadd.s32 %s187, %s185
        %s189 = smul.addr %s188, 8
        %s190 = scalar_lea.vmem %s2, %s189
        %s191 = smul.u32 4, %s20
        %v192 = vld [vmem:[%s1] sm:$0xff]
        %v193 = vld [vmem:[%s1 + $0x8] sm:$0x3f]
        %v194 = vld [vmem:[%s157] sm:$0x7]
        %v195 = vld [vmem:[%s157 + $0x10] sm:$0x7]
        %v196 = vld [vmem:[%s157 + $0x20] sm:$0x7]
        %v197 = vld [vmem:[%s157 + $0x30] sm:$0x7]
        %v202 = vrot.slane %v194, 1
        %v203 = vrot.slane %v195, 1
        %v204 = vrot.slane %v196, 1
        %v205 = vrot.slane %v197, 1
        %v210 = vmax.f32 %v194, %v202
        %v211 = vmax.f32 %v195, %v203
        %v212 = vmax.f32 %v196, %v204
        %v213 = vmax.f32 %v197, %v205
        %v214 = vrot.slane %v194, 2
        %v215 = vrot.slane %v195, 2
        %v216 = vrot.slane %v196, 2
        %v217 = vrot.slane %v197, 2
        %v222 = vmax.f32 %v210, %v214
        %v223 = vmax.f32 %v211, %v215
        %v224 = vmax.f32 %v212, %v216
        %v225 = vmax.f32 %v213, %v217
        %230 = vrot.lane.b32.xlu0 %v222, 127
        %v231 = vpop.permute.xlu0 %230
        %232 = vrot.lane.b32.xlu0 %v223, 127
        %v233 = vpop.permute.xlu0 %232
        %234 = vrot.lane.b32.xlu0 %v224, 127
        %v235 = vpop.permute.xlu0 %234
        %236 = vrot.lane.b32.xlu0 %v225, 127
        %v237 = vpop.permute.xlu0 %236
        %v242 = vmax.f32 %v222, %v231
        %v243 = vmax.f32 %v223, %v233
        %v244 = vmax.f32 %v224, %v235
        %v245 = vmax.f32 %v225, %v237
        %246 = vrot.lane.b32.xlu0 %v222, 126
        %v247 = vpop.permute.xlu0 %246
        %248 = vrot.lane.b32.xlu0 %v223, 126
        %v249 = vpop.permute.xlu0 %248
        %250 = vrot.lane.b32.xlu0 %v224, 126
        %v251 = vpop.permute.xlu0 %250
        %252 = vrot.lane.b32.xlu0 %v225, 126
        %v253 = vpop.permute.xlu0 %252
        %v258 = vmax.f32 %v242, %v247
        %v259 = vmax.f32 %v243, %v249
        %v260 = vmax.f32 %v244, %v251
        %v261 = vmax.f32 %v245, %v253
        %v266 = vrot.slane %v259, 7
        %vm267 = vcmask 1041409
        %v268 = vsel %vm267, %v266, %v258
        %v269 = vrot.slane %v260, 6
        %vm270 = vcmask 1042434
        %v271 = vsel %vm270, %v269, %v268
        %v272 = vrot.slane %v261, 5
        %vm273 = vcmask 1043459
        %v274 = vsel %vm273, %v272, %v271
        %vm275 = vcmask 113664
        %v276 = vsel %vm275, %v274, 0
        %vm278 = vcmask 1045504
        %v280 = vsel %vm278, %v193, 0
        %282 = vmatprep.subr.mxu0 0.0
        %v283 = vand.u32 %v192, 4294901760
        %284 = vmatpush1.msra.mxu0 %v283
        %285 = vmatprep.subr.mxu0 0.0
        %v286 = vand.u32 %v280, 4294901760
        %287 = vmatpush1.msra.mxu0 %v286
        %288 = vmatprep.subr.mxu0 0.0
        %289 = vmatpush1.msra.mxu0 0.0
        %290 = vmatprep.subr.mxu0 0.0
        %291 = vmatpush1.msra.mxu0 0.0
        %292 = vmatprep.subr.mxu0 0.0
        %293 = vmatpush1.msra.mxu0 0.0
        %294 = vmatprep.subr.mxu0 0.0
        %295 = vmatpush1.msra.mxu0 0.0
        %296 = vmatprep.subr.mxu0 0.0
        %297 = vmatpush1.msra.mxu0 0.0
        %298 = vmatprep.subr.mxu0 0.0
        %299 = vmatpush1.msra.mxu0 0.0
        %300 = vmatprep.subr.mxu0 0.0
        %301 = vmatpush1.msra.mxu0 0.0
        %302 = vmatprep.subr.mxu0 0.0
        %303 = vmatpush1.msra.mxu0 0.0
        %304 = vmatprep.subr.mxu0 0.0
        %305 = vmatpush1.msra.mxu0 0.0
        %306 = vmatprep.subr.mxu0 0.0
        %307 = vmatpush1.msra.mxu0 0.0
        %308 = vmatprep.subr.mxu0 0.0
        %309 = vmatpush1.msra.mxu0 0.0
        %310 = vmatprep.subr.mxu0 0.0
        %311 = vmatpush1.msra.mxu0 0.0
        %312 = vmatprep.subr.mxu0 0.0
        %313 = vmatpush1.msra.mxu0 0.0
        %314 = vmatprep.subr.mxu0 0.0
        %315 = vmatpush1.msra.mxu0 0.0
        %316 = vmatprep.subr.mxu0 0.0
        %317 = vmatpush1.msra.mxu0 0.0
        %318 = vmatprep.subr.mxu0 0.0
        %319 = vmatpush1.msra.mxu0 0.0
        %320 = vmatprep.subr.mxu0 0.0
        %321 = vmatpush1.msra.mxu0 0.0
        %322 = vmatprep.subr.mxu0 0.0
        %323 = vmatpush1.msra.mxu0 0.0
        %324 = vmatprep.subr.mxu0 0.0
        %325 = vmatpush1.msra.mxu0 0.0
        %326 = vmatprep.subr.mxu0 0.0
        %327 = vmatpush1.msra.mxu0 0.0
        %328 = vmatprep.subr.mxu0 0.0
        %329 = vmatpush1.msra.mxu0 0.0
        %330 = vmatprep.subr.mxu0 0.0
        %331 = vmatpush1.msra.mxu0 0.0
        %332 = vmatprep.subr.mxu0 0.0
        %333 = vmatpush1.msra.mxu0 0.0
        %334 = vmatprep.subr.mxu0 0.0
        %335 = vmatpush1.msra.mxu0 0.0
        %336 = vmatprep.subr.mxu0 0.0
        %337 = vmatpush1.msra.mxu0 0.0
        %338 = vmatprep.subr.mxu0 0.0
        %339 = vmatpush1.msra.mxu0 0.0
        %340 = vmatprep.subr.mxu0 0.0
        %341 = vmatpush1.msra.mxu0 0.0
        %342 = vmatprep.subr.mxu0 0.0
        %343 = vmatpush1.msra.mxu0 0.0
        %344 = vmatprep.subr.mxu0 0.0
        %345 = vmatpush1.msra.mxu0 0.0
        %346 = vmatprep.subr.mxu0 0.0
        %347 = vmatpush1.msra.mxu0 0.0
        %348 = vmatprep.mubr.f32.mxu0 0.0
        %v349 = vand.u32 %v276, 4294901760
        %v350 = vsub.f32 %v276, %v349
        %v351 = vand.u32 %v350, 4294901760
        %v352 = vsub.f32 %v350, %v351
        %v353 = vand.u32 %v352, 4294901760
        %354 = vmatmul.mubr.f32.gmra.mrb[0].mxu0 %v353
        %v355 = vpop.f32.mrb[0].mxu0
        %v356 = vadd.f32 0.0, %v355
        %v357 = vpop.f32.mrb[0].mxu0
        %358 = vdwg.mxu0
        %359 = vmatprep.subr.mxu0 0.0
        %v360 = vand.u32 %v192, 4294901760
        %v361 = vsub.f32 %v192, %v360
        %v362 = vand.u32 %v361, 4294901760
        %v363 = vsub.f32 %v361, %v362
        %v364 = vand.u32 %v363, 4294901760
        %365 = vmatpush1.msra.mxu0 %v364
        %366 = vmatprep.subr.mxu0 0.0
        %v367 = vand.u32 %v280, 4294901760
        %v368 = vsub.f32 %v280, %v367
        %v369 = vand.u32 %v368, 4294901760
        %v370 = vsub.f32 %v368, %v369
        %v371 = vand.u32 %v370, 4294901760
        %372 = vmatpush1.msra.mxu0 %v371
        %373 = vmatprep.subr.mxu0 0.0
        %374 = vmatpush1.msra.mxu0 0.0
        %375 = vmatprep.subr.mxu0 0.0
        %376 = vmatpush1.msra.mxu0 0.0
        %377 = vmatprep.subr.mxu0 0.0
        %378 = vmatpush1.msra.mxu0 0.0
        %379 = vmatprep.subr.mxu0 0.0
        %380 = vmatpush1.msra.mxu0 0.0
        %381 = vmatprep.subr.mxu0 0.0
        %382 = vmatpush1.msra.mxu0 0.0
        %383 = vmatprep.subr.mxu0 0.0
        %384 = vmatpush1.msra.mxu0 0.0
        %385 = vmatprep.subr.mxu0 0.0
        %386 = vmatpush1.msra.mxu0 0.0
        %387 = vmatprep.subr.mxu0 0.0
        %388 = vmatpush1.msra.mxu0 0.0
        %389 = vmatprep.subr.mxu0 0.0
        %390 = vmatpush1.msra.mxu0 0.0
        %391 = vmatprep.subr.mxu0 0.0
        %392 = vmatpush1.msra.mxu0 0.0
        %393 = vmatprep.subr.mxu0 0.0
        %394 = vmatpush1.msra.mxu0 0.0
        %395 = vmatprep.subr.mxu0 0.0
        %396 = vmatpush1.msra.mxu0 0.0
        %397 = vmatprep.subr.mxu0 0.0
        %398 = vmatpush1.msra.mxu0 0.0
        %399 = vmatprep.subr.mxu0 0.0
        %400 = vmatpush1.msra.mxu0 0.0
        %401 = vmatprep.subr.mxu0 0.0
        %402 = vmatpush1.msra.mxu0 0.0
        %403 = vmatprep.subr.mxu0 0.0
        %404 = vmatpush1.msra.mxu0 0.0
        %405 = vmatprep.subr.mxu0 0.0
        %406 = vmatpush1.msra.mxu0 0.0
        %407 = vmatprep.subr.mxu0 0.0
        %408 = vmatpush1.msra.mxu0 0.0
        %409 = vmatprep.subr.mxu0 0.0
        %410 = vmatpush1.msra.mxu0 0.0
        %411 = vmatprep.subr.mxu0 0.0
        %412 = vmatpush1.msra.mxu0 0.0
        %413 = vmatprep.subr.mxu0 0.0
        %414 = vmatpush1.msra.mxu0 0.0
        %415 = vmatprep.subr.mxu0 0.0
        %416 = vmatpush1.msra.mxu0 0.0
        %417 = vmatprep.subr.mxu0 0.0
        %418 = vmatpush1.msra.mxu0 0.0
        %419 = vmatprep.subr.mxu0 0.0
        %420 = vmatpush1.msra.mxu0 0.0
        %421 = vmatprep.subr.mxu0 0.0
        %422 = vmatpush1.msra.mxu0 0.0
        %423 = vmatprep.subr.mxu0 0.0
        %424 = vmatpush1.msra.mxu0 0.0
        %425 = vmatprep.subr.mxu0 0.0
        %426 = vmatpush1.msra.mxu0 0.0
        %427 = vmatprep.subr.mxu0 0.0
        %428 = vmatpush1.msra.mxu0 0.0
        %429 = vmatprep.subr.mxu0 0.0
        %430 = vmatpush1.msra.mxu0 0.0
        %431 = vmatprep.subr.mxu0 0.0
        %432 = vmatpush1.msra.mxu0 0.0
        %433 = vmatprep.mubr.f32.mxu0 0.0
        %v434 = vand.u32 %v276, 4294901760
        %435 = vmatmul.mubr.f32.gmra.mrb[0].mxu0 %v434
        %v436 = vpop.f32.mrb[0].mxu0
        %v437 = vadd.f32 %v356, %v436
        %v438 = vpop.f32.mrb[0].mxu0
        %439 = vdwg.mxu0
        %440 = vmatprep.subr.mxu0 0.0
        %v441 = vand.u32 %v192, 4294901760
        %v442 = vsub.f32 %v192, %v441
        %443 = vmatpush1.msra.mxu0 %v442
        %444 = vmatprep.subr.mxu0 0.0
        %v445 = vand.u32 %v280, 4294901760
        %v446 = vsub.f32 %v280, %v445
        %447 = vmatpush1.msra.mxu0 %v446
        %448 = vmatprep.subr.mxu0 0.0
        %449 = vmatpush1.msra.mxu0 0.0
        %450 = vmatprep.subr.mxu0 0.0
        %451 = vmatpush1.msra.mxu0 0.0
        %452 = vmatprep.subr.mxu0 0.0
        %453 = vmatpush1.msra.mxu0 0.0
        %454 = vmatprep.subr.mxu0 0.0
        %455 = vmatpush1.msra.mxu0 0.0
        %456 = vmatprep.subr.mxu0 0.0
        %457 = vmatpush1.msra.mxu0 0.0
        %458 = vmatprep.subr.mxu0 0.0
        %459 = vmatpush1.msra.mxu0 0.0
        %460 = vmatprep.subr.mxu0 0.0
        %461 = vmatpush1.msra.mxu0 0.0
        %462 = vmatprep.subr.mxu0 0.0
        %463 = vmatpush1.msra.mxu0 0.0
        %464 = vmatprep.subr.mxu0 0.0
        %465 = vmatpush1.msra.mxu0 0.0
        %466 = vmatprep.subr.mxu0 0.0
        %467 = vmatpush1.msra.mxu0 0.0
        %468 = vmatprep.subr.mxu0 0.0
        %469 = vmatpush1.msra.mxu0 0.0
        %470 = vmatprep.subr.mxu0 0.0
        %471 = vmatpush1.msra.mxu0 0.0
        %472 = vmatprep.subr.mxu0 0.0
        %473 = vmatpush1.msra.mxu0 0.0
        %474 = vmatprep.subr.mxu0 0.0
        %475 = vmatpush1.msra.mxu0 0.0
        %476 = vmatprep.subr.mxu0 0.0
        %477 = vmatpush1.msra.mxu0 0.0
        %478 = vmatprep.subr.mxu0 0.0
        %479 = vmatpush1.msra.mxu0 0.0
        %480 = vmatprep.subr.mxu0 0.0
        %481 = vmatpush1.msra.mxu0 0.0
        %482 = vmatprep.subr.mxu0 0.0
        %483 = vmatpush1.msra.mxu0 0.0
        %484 = vmatprep.subr.mxu0 0.0
        %485 = vmatpush1.msra.mxu0 0.0
        %486 = vmatprep.subr.mxu0 0.0
        %487 = vmatpush1.msra.mxu0 0.0
        %488 = vmatprep.subr.mxu0 0.0
        %489 = vmatpush1.msra.mxu0 0.0
        %490 = vmatprep.subr.mxu0 0.0
        %491 = vmatpush1.msra.mxu0 0.0
        %492 = vmatprep.subr.mxu0 0.0
        %493 = vmatpush1.msra.mxu0 0.0
        %494 = vmatprep.subr.mxu0 0.0
        %495 = vmatpush1.msra.mxu0 0.0
        %496 = vmatprep.subr.mxu0 0.0
        %497 = vmatpush1.msra.mxu0 0.0
        %498 = vmatprep.subr.mxu0 0.0
        %499 = vmatpush1.msra.mxu0 0.0
        %500 = vmatprep.subr.mxu0 0.0
        %501 = vmatpush1.msra.mxu0 0.0
        %502 = vmatprep.subr.mxu0 0.0
        %503 = vmatpush1.msra.mxu0 0.0
        %504 = vmatprep.subr.mxu0 0.0
        %505 = vmatpush1.msra.mxu0 0.0
        %506 = vmatprep.subr.mxu0 0.0
        %507 = vmatpush1.msra.mxu0 0.0
        %508 = vmatprep.mubr.f32.mxu0 0.0
        %v509 = vand.u32 %v276, 4294901760
        %v510 = vsub.f32 %v276, %v509
        %511 = vmatmul.mubr.f32.gmra.mrb[0].mxu0 %v510
        %v512 = vpop.f32.mrb[0].mxu0
        %v513 = vadd.f32 %v437, %v512
        %v514 = vpop.f32.mrb[0].mxu0
        %515 = vdwg.mxu0
        %516 = vmatprep.subr.mxu0 0.0
        %v517 = vand.u32 %v192, 4294901760
        %518 = vmatpush1.msra.mxu0 %v517
        %519 = vmatprep.subr.mxu0 0.0
        %v520 = vand.u32 %v280, 4294901760
        %521 = vmatpush1.msra.mxu0 %v520
        %522 = vmatprep.subr.mxu0 0.0
        %523 = vmatpush1.msra.mxu0 0.0
        %524 = vmatprep.subr.mxu0 0.0
        %525 = vmatpush1.msra.mxu0 0.0
        %526 = vmatprep.subr.mxu0 0.0
        %527 = vmatpush1.msra.mxu0 0.0
        %528 = vmatprep.subr.mxu0 0.0
        %529 = vmatpush1.msra.mxu0 0.0
        %530 = vmatprep.subr.mxu0 0.0
        %531 = vmatpush1.msra.mxu0 0.0
        %532 = vmatprep.subr.mxu0 0.0
        %533 = vmatpush1.msra.mxu0 0.0
        %534 = vmatprep.subr.mxu0 0.0
        %535 = vmatpush1.msra.mxu0 0.0
        %536 = vmatprep.subr.mxu0 0.0
        %537 = vmatpush1.msra.mxu0 0.0
        %538 = vmatprep.subr.mxu0 0.0
        %539 = vmatpush1.msra.mxu0 0.0
        %540 = vmatprep.subr.mxu0 0.0
        %541 = vmatpush1.msra.mxu0 0.0
        %542 = vmatprep.subr.mxu0 0.0
        %543 = vmatpush1.msra.mxu0 0.0
        %544 = vmatprep.subr.mxu0 0.0
        %545 = vmatpush1.msra.mxu0 0.0
        %546 = vmatprep.subr.mxu0 0.0
        %547 = vmatpush1.msra.mxu0 0.0
        %548 = vmatprep.subr.mxu0 0.0
        %549 = vmatpush1.msra.mxu0 0.0
        %550 = vmatprep.subr.mxu0 0.0
        %551 = vmatpush1.msra.mxu0 0.0
        %552 = vmatprep.subr.mxu0 0.0
        %553 = vmatpush1.msra.mxu0 0.0
        %554 = vmatprep.subr.mxu0 0.0
        %555 = vmatpush1.msra.mxu0 0.0
        %556 = vmatprep.subr.mxu0 0.0
        %557 = vmatpush1.msra.mxu0 0.0
        %558 = vmatprep.subr.mxu0 0.0
        %559 = vmatpush1.msra.mxu0 0.0
        %560 = vmatprep.subr.mxu0 0.0
        %561 = vmatpush1.msra.mxu0 0.0
        %562 = vmatprep.subr.mxu0 0.0
        %563 = vmatpush1.msra.mxu0 0.0
        %564 = vmatprep.subr.mxu0 0.0
        %565 = vmatpush1.msra.mxu0 0.0
        %566 = vmatprep.subr.mxu0 0.0
        %567 = vmatpush1.msra.mxu0 0.0
        %568 = vmatprep.subr.mxu0 0.0
        %569 = vmatpush1.msra.mxu0 0.0
        %570 = vmatprep.subr.mxu0 0.0
        %571 = vmatpush1.msra.mxu0 0.0
        %572 = vmatprep.subr.mxu0 0.0
        %573 = vmatpush1.msra.mxu0 0.0
        %574 = vmatprep.subr.mxu0 0.0
        %575 = vmatpush1.msra.mxu0 0.0
        %576 = vmatprep.subr.mxu0 0.0
        %577 = vmatpush1.msra.mxu0 0.0
        %578 = vmatprep.subr.mxu0 0.0
        %579 = vmatpush1.msra.mxu0 0.0
        %580 = vmatprep.subr.mxu0 0.0
        %581 = vmatpush1.msra.mxu0 0.0
        %582 = vmatprep.mubr.f32.mxu0 0.0
        %v583 = vand.u32 %v276, 4294901760
        %v584 = vsub.f32 %v276, %v583
        %v585 = vand.u32 %v584, 4294901760
        %586 = vmatmul.mubr.f32.gmra.mrb[0].mxu0 %v585
        %v587 = vpop.f32.mrb[0].mxu0
        %v588 = vadd.f32 %v513, %v587
        %v589 = vpop.f32.mrb[0].mxu0
        %590 = vdwg.mxu0
        %591 = vmatprep.subr.mxu0 0.0
        %v592 = vand.u32 %v192, 4294901760
        %v593 = vsub.f32 %v192, %v592
        %v594 = vand.u32 %v593, 4294901760
        %595 = vmatpush1.msra.mxu0 %v594
        %596 = vmatprep.subr.mxu0 0.0
        %v597 = vand.u32 %v280, 4294901760
        %v598 = vsub.f32 %v280, %v597
        %v599 = vand.u32 %v598, 4294901760
        %600 = vmatpush1.msra.mxu0 %v599
        %601 = vmatprep.subr.mxu0 0.0
        %602 = vmatpush1.msra.mxu0 0.0
        %603 = vmatprep.subr.mxu0 0.0
        %604 = vmatpush1.msra.mxu0 0.0
        %605 = vmatprep.subr.mxu0 0.0
        %606 = vmatpush1.msra.mxu0 0.0
        %607 = vmatprep.subr.mxu0 0.0
        %608 = vmatpush1.msra.mxu0 0.0
        %609 = vmatprep.subr.mxu0 0.0
        %610 = vmatpush1.msra.mxu0 0.0
        %611 = vmatprep.subr.mxu0 0.0
        %612 = vmatpush1.msra.mxu0 0.0
        %613 = vmatprep.subr.mxu0 0.0
        %614 = vmatpush1.msra.mxu0 0.0
        %615 = vmatprep.subr.mxu0 0.0
        %616 = vmatpush1.msra.mxu0 0.0
        %617 = vmatprep.subr.mxu0 0.0
        %618 = vmatpush1.msra.mxu0 0.0
        %619 = vmatprep.subr.mxu0 0.0
        %620 = vmatpush1.msra.mxu0 0.0
        %621 = vmatprep.subr.mxu0 0.0
        %622 = vmatpush1.msra.mxu0 0.0
        %623 = vmatprep.subr.mxu0 0.0
        %624 = vmatpush1.msra.mxu0 0.0
        %625 = vmatprep.subr.mxu0 0.0
        %626 = vmatpush1.msra.mxu0 0.0
        %627 = vmatprep.subr.mxu0 0.0
        %628 = vmatpush1.msra.mxu0 0.0
        %629 = vmatprep.subr.mxu0 0.0
        %630 = vmatpush1.msra.mxu0 0.0
        %631 = vmatprep.subr.mxu0 0.0
        %632 = vmatpush1.msra.mxu0 0.0
        %633 = vmatprep.subr.mxu0 0.0
        %634 = vmatpush1.msra.mxu0 0.0
        %635 = vmatprep.subr.mxu0 0.0
        %636 = vmatpush1.msra.mxu0 0.0
        %637 = vmatprep.subr.mxu0 0.0
        %638 = vmatpush1.msra.mxu0 0.0
        %639 = vmatprep.subr.mxu0 0.0
        %640 = vmatpush1.msra.mxu0 0.0
        %641 = vmatprep.subr.mxu0 0.0
        %642 = vmatpush1.msra.mxu0 0.0
        %643 = vmatprep.subr.mxu0 0.0
        %644 = vmatpush1.msra.mxu0 0.0
        %645 = vmatprep.subr.mxu0 0.0
        %646 = vmatpush1.msra.mxu0 0.0
        %647 = vmatprep.subr.mxu0 0.0
        %648 = vmatpush1.msra.mxu0 0.0
        %649 = vmatprep.subr.mxu0 0.0
        %650 = vmatpush1.msra.mxu0 0.0
        %651 = vmatprep.subr.mxu0 0.0
        %652 = vmatpush1.msra.mxu0 0.0
        %653 = vmatprep.subr.mxu0 0.0
        %654 = vmatpush1.msra.mxu0 0.0
        %655 = vmatprep.subr.mxu0 0.0
        %656 = vmatpush1.msra.mxu0 0.0
        %657 = vmatprep.subr.mxu0 0.0
        %658 = vmatpush1.msra.mxu0 0.0
        %659 = vmatprep.subr.mxu0 0.0
        %660 = vmatpush1.msra.mxu0 0.0
        %661 = vmatprep.mubr.f32.mxu0 0.0
        %v662 = vand.u32 %v276, 4294901760
        %663 = vmatmul.mubr.f32.gmra.mrb[0].mxu0 %v662
        %v664 = vpop.f32.mrb[0].mxu0
        %v665 = vadd.f32 %v588, %v664
        %v666 = vpop.f32.mrb[0].mxu0
        %667 = vdwg.mxu0
        %668 = vmatprep.subr.mxu0 0.0
        %v669 = vand.u32 %v192, 4294901760
        %670 = vmatpush1.msra.mxu0 %v669
        %671 = vmatprep.subr.mxu0 0.0
        %v672 = vand.u32 %v280, 4294901760
        %673 = vmatpush1.msra.mxu0 %v672
        %674 = vmatprep.subr.mxu0 0.0
        %675 = vmatpush1.msra.mxu0 0.0
        %676 = vmatprep.subr.mxu0 0.0
        %677 = vmatpush1.msra.mxu0 0.0
        %678 = vmatprep.subr.mxu0 0.0
        %679 = vmatpush1.msra.mxu0 0.0
        %680 = vmatprep.subr.mxu0 0.0
        %681 = vmatpush1.msra.mxu0 0.0
        %682 = vmatprep.subr.mxu0 0.0
        %683 = vmatpush1.msra.mxu0 0.0
        %684 = vmatprep.subr.mxu0 0.0
        %685 = vmatpush1.msra.mxu0 0.0
        %686 = vmatprep.subr.mxu0 0.0
        %687 = vmatpush1.msra.mxu0 0.0
        %688 = vmatprep.subr.mxu0 0.0
        %689 = vmatpush1.msra.mxu0 0.0
        %690 = vmatprep.subr.mxu0 0.0
        %691 = vmatpush1.msra.mxu0 0.0
        %692 = vmatprep.subr.mxu0 0.0
        %693 = vmatpush1.msra.mxu0 0.0
        %694 = vmatprep.subr.mxu0 0.0
        %695 = vmatpush1.msra.mxu0 0.0
        %696 = vmatprep.subr.mxu0 0.0
        %697 = vmatpush1.msra.mxu0 0.0
        %698 = vmatprep.subr.mxu0 0.0
        %699 = vmatpush1.msra.mxu0 0.0
        %700 = vmatprep.subr.mxu0 0.0
        %701 = vmatpush1.msra.mxu0 0.0
        %702 = vmatprep.subr.mxu0 0.0
        %703 = vmatpush1.msra.mxu0 0.0
        %704 = vmatprep.subr.mxu0 0.0
        %705 = vmatpush1.msra.mxu0 0.0
        %706 = vmatprep.subr.mxu0 0.0
        %707 = vmatpush1.msra.mxu0 0.0
        %708 = vmatprep.subr.mxu0 0.0
        %709 = vmatpush1.msra.mxu0 0.0
        %710 = vmatprep.subr.mxu0 0.0
        %711 = vmatpush1.msra.mxu0 0.0
        %712 = vmatprep.subr.mxu0 0.0
        %713 = vmatpush1.msra.mxu0 0.0
        %714 = vmatprep.subr.mxu0 0.0
        %715 = vmatpush1.msra.mxu0 0.0
        %716 = vmatprep.subr.mxu0 0.0
        %717 = vmatpush1.msra.mxu0 0.0
        %718 = vmatprep.subr.mxu0 0.0
        %719 = vmatpush1.msra.mxu0 0.0
        %720 = vmatprep.subr.mxu0 0.0
        %721 = vmatpush1.msra.mxu0 0.0
        %722 = vmatprep.subr.mxu0 0.0
        %723 = vmatpush1.msra.mxu0 0.0
        %724 = vmatprep.subr.mxu0 0.0
        %725 = vmatpush1.msra.mxu0 0.0
        %726 = vmatprep.subr.mxu0 0.0
        %727 = vmatpush1.msra.mxu0 0.0
        %728 = vmatprep.subr.mxu0 0.0
        %729 = vmatpush1.msra.mxu0 0.0
        %730 = vmatprep.subr.mxu0 0.0
        %731 = vmatpush1.msra.mxu0 0.0
        %732 = vmatprep.subr.mxu0 0.0
        %733 = vmatpush1.msra.mxu0 0.0
        %734 = vmatprep.mubr.f32.mxu0 0.0
        %v735 = vand.u32 %v276, 4294901760
        %736 = vmatmul.mubr.f32.gmra.mrb[0].mxu0 %v735
        %v737 = vpop.f32.mrb[0].mxu0
        %v738 = vadd.f32 %v665, %v737
        %v739 = vpop.f32.mrb[0].mxu0
        %740 = vdwg.mxu0
        %v743 = vunpack.c.l.s4 1966171168
        %v744 = vunpack.c.0.s8 %v743
        %v745 = vlaneseq
        %v746 = vshrl.u32 %v745, 7
        %v747 = vsub.s32 %v744, %v746
        %v748 = vrot.slane %v738, %v747
        %v749 = vcombine.high %v748, %v748
        %v751 = vunpack.c.l.s4 1966171168
        %v752 = vunpack.c.0.s8 %v751
        %v753 = vlaneseq
        %v754 = vshrl.u32 %v753, 7
        %v755 = vsub.s32 %v752, %v754
        %v756 = vrot.slane %v748, %v755
        %v758 = vunpack.c.l.s4 1966171168
        %v759 = vunpack.c.0.s8 %v758
        %v760 = vlaneseq
        %v761 = vshrl.u32 %v760, 7
        %v762 = vsub.s32 %v759, %v761
        %v763 = vrot.slane %v749, %v762
        %v764 = vcombine.high %v756, %v756
        %v765 = vcombine.high %v763, %v763
        %vm770 = vcmask 32768
        %771 = vst.msk [vmem:[%s190] sm:$0x1] %vm770, %v756
        %772 = vst.msk [vmem:[%s190 + $0x8] sm:$0x1] %vm770, %v763
        %773 = vst.msk [vmem:[%s190 + $0x10] sm:$0x1] %vm770, %v764
        %774 = vst.msk [vmem:[%s190 + $0x18] sm:$0x1] %vm770, %v765
        %v775 = vld [vmem:[%s157 + $0x3] sm:$0x7]
        %v776 = vld [vmem:[%s157 + $0x13] sm:$0x7]
        %v777 = vld [vmem:[%s157 + $0x23] sm:$0x7]
        %v778 = vld [vmem:[%s157 + $0x33] sm:$0x7]
        %v783 = vrot.slane %v775, 1
        %v784 = vrot.slane %v776, 1
        %v785 = vrot.slane %v777, 1
        %v786 = vrot.slane %v778, 1
        %v791 = vmax.f32 %v775, %v783
        %v792 = vmax.f32 %v776, %v784
        %v793 = vmax.f32 %v777, %v785
        %v794 = vmax.f32 %v778, %v786
        %v795 = vrot.slane %v775, 2
        %v796 = vrot.slane %v776, 2
        %v797 = vrot.slane %v777, 2
        %v798 = vrot.slane %v778, 2
        %v803 = vmax.f32 %v791, %v795
        %v804 = vmax.f32 %v792, %v796
        %v805 = vmax.f32 %v793, %v797
        %v806 = vmax.f32 %v794, %v798
        %811 = vrot.lane.b32.xlu0 %v803, 127
        %v812 = vpop.permute.xlu0 %811
        %813 = vrot.lane.b32.xlu0 %v804, 127
        %v814 = vpop.permute.xlu0 %813
        %815 = vrot.lane.b32.xlu0 %v805, 127
        %v816 = vpop.permute.xlu0 %815
        %817 = vrot.lane.b32.xlu0 %v806, 127
        %v818 = vpop.permute.xlu0 %817
        %v823 = vmax.f32 %v803, %v812
        %v824 = vmax.f32 %v804, %v814
        %v825 = vmax.f32 %v805, %v816
        %v826 = vmax.f32 %v806, %v818
        %827 = vrot.lane.b32.xlu0 %v803, 126
        %v828 = vpop.permute.xlu0 %827
        %829 = vrot.lane.b32.xlu0 %v804, 126
        %v830 = vpop.permute.xlu0 %829
        %831 = vrot.lane.b32.xlu0 %v805, 126
        %v832 = vpop.permute.xlu0 %831
        %833 = vrot.lane.b32.xlu0 %v806, 126
        %v834 = vpop.permute.xlu0 %833
        %v839 = vmax.f32 %v823, %v828
        %v840 = vmax.f32 %v824, %v830
        %v841 = vmax.f32 %v825, %v832
        %v842 = vmax.f32 %v826, %v834
        %v847 = vrot.slane %v840, 7
        %v848 = vsel %vm267, %v847, %v839
        %v849 = vrot.slane %v841, 6
        %v850 = vsel %vm270, %v849, %v848
        %v851 = vrot.slane %v842, 5
        %v852 = vsel %vm273, %v851, %v850
        %v853 = vsel %vm275, %v852, 0
        %855 = vmatprep.subr.mxu0 0.0
        %v856 = vand.u32 %v192, 4294901760
        %857 = vmatpush1.msra.mxu0 %v856
        %858 = vmatprep.subr.mxu0 0.0
        %v859 = vand.u32 %v280, 4294901760
        %860 = vmatpush1.msra.mxu0 %v859
        %861 = vmatprep.subr.mxu0 0.0
        %862 = vmatpush1.msra.mxu0 0.0
        %863 = vmatprep.subr.mxu0 0.0
        %864 = vmatpush1.msra.mxu0 0.0
        %865 = vmatprep.subr.mxu0 0.0
        %866 = vmatpush1.msra.mxu0 0.0
        %867 = vmatprep.subr.mxu0 0.0
        %868 = vmatpush1.msra.mxu0 0.0
        %869 = vmatprep.subr.mxu0 0.0
        %870 = vmatpush1.msra.mxu0 0.0
        %871 = vmatprep.subr.mxu0 0.0
        %872 = vmatpush1.msra.mxu0 0.0
        %873 = vmatprep.subr.mxu0 0.0
        %874 = vmatpush1.msra.mxu0 0.0
        %875 = vmatprep.subr.mxu0 0.0
        %876 = vmatpush1.msra.mxu0 0.0
        %877 = vmatprep.subr.mxu0 0.0
        %878 = vmatpush1.msra.mxu0 0.0
        %879 = vmatprep.subr.mxu0 0.0
        %880 = vmatpush1.msra.mxu0 0.0
        %881 = vmatprep.subr.mxu0 0.0
        %882 = vmatpush1.msra.mxu0 0.0
        %883 = vmatprep.subr.mxu0 0.0
        %884 = vmatpush1.msra.mxu0 0.0
        %885 = vmatprep.subr.mxu0 0.0
        %886 = vmatpush1.msra.mxu0 0.0
        %887 = vmatprep.subr.mxu0 0.0
        %888 = vmatpush1.msra.mxu0 0.0
        %889 = vmatprep.subr.mxu0 0.0
        %890 = vmatpush1.msra.mxu0 0.0
        %891 = vmatprep.subr.mxu0 0.0
        %892 = vmatpush1.msra.mxu0 0.0
        %893 = vmatprep.subr.mxu0 0.0
        %894 = vmatpush1.msra.mxu0 0.0
        %895 = vmatprep.subr.mxu0 0.0
        %896 = vmatpush1.msra.mxu0 0.0
        %897 = vmatprep.subr.mxu0 0.0
        %898 = vmatpush1.msra.mxu0 0.0
        %899 = vmatprep.subr.mxu0 0.0
        %900 = vmatpush1.msra.mxu0 0.0
        %901 = vmatprep.subr.mxu0 0.0
        %902 = vmatpush1.msra.mxu0 0.0
        %903 = vmatprep.subr.mxu0 0.0
        %904 = vmatpush1.msra.mxu0 0.0
        %905 = vmatprep.subr.mxu0 0.0
        %906 = vmatpush1.msra.mxu0 0.0
        %907 = vmatprep.subr.mxu0 0.0
        %908 = vmatpush1.msra.mxu0 0.0
        %909 = vmatprep.subr.mxu0 0.0
        %910 = vmatpush1.msra.mxu0 0.0
        %911 = vmatprep.subr.mxu0 0.0
        %912 = vmatpush1.msra.mxu0 0.0
        %913 = vmatprep.subr.mxu0 0.0
        %914 = vmatpush1.msra.mxu0 0.0
        %915 = vmatprep.subr.mxu0 0.0
        %916 = vmatpush1.msra.mxu0 0.0
        %917 = vmatprep.subr.mxu0 0.0
        %918 = vmatpush1.msra.mxu0 0.0
        %919 = vmatprep.subr.mxu0 0.0
        %920 = vmatpush1.msra.mxu0 0.0
        %921 = vmatprep.mubr.f32.mxu0 0.0
        %v922 = vand.u32 %v853, 4294901760
        %v923 = vsub.f32 %v853, %v922
        %v924 = vand.u32 %v923, 4294901760
        %v925 = vsub.f32 %v923, %v924
        %v926 = vand.u32 %v925, 4294901760
        %927 = vmatmul.mubr.f32.gmra.mrb[0].mxu0 %v926
        %v928 = vpop.f32.mrb[0].mxu0
        %v929 = vadd.f32 0.0, %v928
        %v930 = vpop.f32.mrb[0].mxu0
        %931 = vdwg.mxu0
        %932 = vmatprep.subr.mxu0 0.0
        %v933 = vand.u32 %v192, 4294901760
        %v934 = vsub.f32 %v192, %v933
        %v935 = vand.u32 %v934, 4294901760
        %v936 = vsub.f32 %v934, %v935
        %v937 = vand.u32 %v936, 4294901760
        %938 = vmatpush1.msra.mxu0 %v937
        %939 = vmatprep.subr.mxu0 0.0
        %v940 = vand.u32 %v280, 4294901760
        %v941 = vsub.f32 %v280, %v940
        %v942 = vand.u32 %v941, 4294901760
        %v943 = vsub.f32 %v941, %v942
        %v944 = vand.u32 %v943, 4294901760
        %945 = vmatpush1.msra.mxu0 %v944
        %946 = vmatprep.subr.mxu0 0.0
        %947 = vmatpush1.msra.mxu0 0.0
        %948 = vmatprep.subr.mxu0 0.0
        %949 = vmatpush1.msra.mxu0 0.0
        %950 = vmatprep.subr.mxu0 0.0
        %951 = vmatpush1.msra.mxu0 0.0
        %952 = vmatprep.subr.mxu0 0.0
        %953 = vmatpush1.msra.mxu0 0.0
        %954 = vmatprep.subr.mxu0 0.0
        %955 = vmatpush1.msra.mxu0 0.0
        %956 = vmatprep.subr.mxu0 0.0
        %957 = vmatpush1.msra.mxu0 0.0
        %958 = vmatprep.subr.mxu0 0.0
        %959 = vmatpush1.msra.mxu0 0.0
        %960 = vmatprep.subr.mxu0 0.0
        %961 = vmatpush1.msra.mxu0 0.0
        %962 = vmatprep.subr.mxu0 0.0
        %963 = vmatpush1.msra.mxu0 0.0
        %964 = vmatprep.subr.mxu0 0.0
        %965 = vmatpush1.msra.mxu0 0.0
        %966 = vmatprep.subr.mxu0 0.0
        %967 = vmatpush1.msra.mxu0 0.0
        %968 = vmatprep.subr.mxu0 0.0
        %969 = vmatpush1.msra.mxu0 0.0
        %970 = vmatprep.subr.mxu0 0.0
        %971 = vmatpush1.msra.mxu0 0.0
        %972 = vmatprep.subr.mxu0 0.0
        %973 = vmatpush1.msra.mxu0 0.0
        %974 = vmatprep.subr.mxu0 0.0
        %975 = vmatpush1.msra.mxu0 0.0
        %976 = vmatprep.subr.mxu0 0.0
        %977 = vmatpush1.msra.mxu0 0.0
        %978 = vmatprep.subr.mxu0 0.0
        %979 = vmatpush1.msra.mxu0 0.0
        %980 = vmatprep.subr.mxu0 0.0
        %981 = vmatpush1.msra.mxu0 0.0
        %982 = vmatprep.subr.mxu0 0.0
        %983 = vmatpush1.msra.mxu0 0.0
        %984 = vmatprep.subr.mxu0 0.0
        %985 = vmatpush1.msra.mxu0 0.0
        %986 = vmatprep.subr.mxu0 0.0
        %987 = vmatpush1.msra.mxu0 0.0
        %988 = vmatprep.subr.mxu0 0.0
        %989 = vmatpush1.msra.mxu0 0.0
        %990 = vmatprep.subr.mxu0 0.0
        %991 = vmatpush1.msra.mxu0 0.0
        %992 = vmatprep.subr.mxu0 0.0
        %993 = vmatpush1.msra.mxu0 0.0
        %994 = vmatprep.subr.mxu0 0.0
        %995 = vmatpush1.msra.mxu0 0.0
        %996 = vmatprep.subr.mxu0 0.0
        %997 = vmatpush1.msra.mxu0 0.0
        %998 = vmatprep.subr.mxu0 0.0
        %999 = vmatpush1.msra.mxu0 0.0
        %1000 = vmatprep.subr.mxu0 0.0
        %1001 = vmatpush1.msra.mxu0 0.0
        %1002 = vmatprep.subr.mxu0 0.0
        %1003 = vmatpush1.msra.mxu0 0.0
        %1004 = vmatprep.subr.mxu0 0.0
        %1005 = vmatpush1.msra.mxu0 0.0
        %1006 = vmatprep.mubr.f32.mxu0 0.0
        %v1007 = vand.u32 %v853, 4294901760
        %1008 = vmatmul.mubr.f32.gmra.mrb[0].mxu0 %v1007
        %v1009 = vpop.f32.mrb[0].mxu0
        %v1010 = vadd.f32 %v929, %v1009
        %v1011 = vpop.f32.mrb[0].mxu0
        %1012 = vdwg.mxu0
        %1013 = vmatprep.subr.mxu0 0.0
        %v1014 = vand.u32 %v192, 4294901760
        %v1015 = vsub.f32 %v192, %v1014
        %1016 = vmatpush1.msra.mxu0 %v1015
        %1017 = vmatprep.subr.mxu0 0.0
        %v1018 = vand.u32 %v280, 4294901760
        %v1019 = vsub.f32 %v280, %v1018
        %1020 = vmatpush1.msra.mxu0 %v1019
        %1021 = vmatprep.subr.mxu0 0.0
        %1022 = vmatpush1.msra.mxu0 0.0
        %1023 = vmatprep.subr.mxu0 0.0
        %1024 = vmatpush1.msra.mxu0 0.0
        %1025 = vmatprep.subr.mxu0 0.0
        %1026 = vmatpush1.msra.mxu0 0.0
        %1027 = vmatprep.subr.mxu0 0.0
        %1028 = vmatpush1.msra.mxu0 0.0
        %1029 = vmatprep.subr.mxu0 0.0
        %1030 = vmatpush1.msra.mxu0 0.0
        %1031 = vmatprep.subr.mxu0 0.0
        %1032 = vmatpush1.msra.mxu0 0.0
        %1033 = vmatprep.subr.mxu0 0.0
        %1034 = vmatpush1.msra.mxu0 0.0
        %1035 = vmatprep.subr.mxu0 0.0
        %1036 = vmatpush1.msra.mxu0 0.0
        %1037 = vmatprep.subr.mxu0 0.0
        %1038 = vmatpush1.msra.mxu0 0.0
        %1039 = vmatprep.subr.mxu0 0.0
        %1040 = vmatpush1.msra.mxu0 0.0
        %1041 = vmatprep.subr.mxu0 0.0
        %1042 = vmatpush1.msra.mxu0 0.0
        %1043 = vmatprep.subr.mxu0 0.0
        %1044 = vmatpush1.msra.mxu0 0.0
        %1045 = vmatprep.subr.mxu0 0.0
        %1046 = vmatpush1.msra.mxu0 0.0
        %1047 = vmatprep.subr.mxu0 0.0
        %1048 = vmatpush1.msra.mxu0 0.0
        %1049 = vmatprep.subr.mxu0 0.0
        %1050 = vmatpush1.msra.mxu0 0.0
        %1051 = vmatprep.subr.mxu0 0.0
        %1052 = vmatpush1.msra.mxu0 0.0
        %1053 = vmatprep.subr.mxu0 0.0
        %1054 = vmatpush1.msra.mxu0 0.0
        %1055 = vmatprep.subr.mxu0 0.0
        %1056 = vmatpush1.msra.mxu0 0.0
        %1057 = vmatprep.subr.mxu0 0.0
        %1058 = vmatpush1.msra.mxu0 0.0
        %1059 = vmatprep.subr.mxu0 0.0
        %1060 = vmatpush1.msra.mxu0 0.0
        %1061 = vmatprep.subr.mxu0 0.0
        %1062 = vmatpush1.msra.mxu0 0.0
        %1063 = vmatprep.subr.mxu0 0.0
        %1064 = vmatpush1.msra.mxu0 0.0
        %1065 = vmatprep.subr.mxu0 0.0
        %1066 = vmatpush1.msra.mxu0 0.0
        %1067 = vmatprep.subr.mxu0 0.0
        %1068 = vmatpush1.msra.mxu0 0.0
        %1069 = vmatprep.subr.mxu0 0.0
        %1070 = vmatpush1.msra.mxu0 0.0
        %1071 = vmatprep.subr.mxu0 0.0
        %1072 = vmatpush1.msra.mxu0 0.0
        %1073 = vmatprep.subr.mxu0 0.0
        %1074 = vmatpush1.msra.mxu0 0.0
        %1075 = vmatprep.subr.mxu0 0.0
        %1076 = vmatpush1.msra.mxu0 0.0
        %1077 = vmatprep.subr.mxu0 0.0
        %1078 = vmatpush1.msra.mxu0 0.0
        %1079 = vmatprep.subr.mxu0 0.0
        %1080 = vmatpush1.msra.mxu0 0.0
        %1081 = vmatprep.mubr.f32.mxu0 0.0
        %v1082 = vand.u32 %v853, 4294901760
        %v1083 = vsub.f32 %v853, %v1082
        %1084 = vmatmul.mubr.f32.gmra.mrb[0].mxu0 %v1083
        %v1085 = vpop.f32.mrb[0].mxu0
        %v1086 = vadd.f32 %v1010, %v1085
        %v1087 = vpop.f32.mrb[0].mxu0
        %1088 = vdwg.mxu0
        %1089 = vmatprep.subr.mxu0 0.0
        %v1090 = vand.u32 %v192, 4294901760
        %1091 = vmatpush1.msra.mxu0 %v1090
        %1092 = vmatprep.subr.mxu0 0.0
        %v1093 = vand.u32 %v280, 4294901760
        %1094 = vmatpush1.msra.mxu0 %v1093
        %1095 = vmatprep.subr.mxu0 0.0
        %1096 = vmatpush1.msra.mxu0 0.0
        %1097 = vmatprep.subr.mxu0 0.0
        %1098 = vmatpush1.msra.mxu0 0.0
        %1099 = vmatprep.subr.mxu0 0.0
        %1100 = vmatpush1.msra.mxu0 0.0
        %1101 = vmatprep.subr.mxu0 0.0
        %1102 = vmatpush1.msra.mxu0 0.0
        %1103 = vmatprep.subr.mxu0 0.0
        %1104 = vmatpush1.msra.mxu0 0.0
        %1105 = vmatprep.subr.mxu0 0.0
        %1106 = vmatpush1.msra.mxu0 0.0
        %1107 = vmatprep.subr.mxu0 0.0
        %1108 = vmatpush1.msra.mxu0 0.0
        %1109 = vmatprep.subr.mxu0 0.0
        %1110 = vmatpush1.msra.mxu0 0.0
        %1111 = vmatprep.subr.mxu0 0.0
        %1112 = vmatpush1.msra.mxu0 0.0
        %1113 = vmatprep.subr.mxu0 0.0
        %1114 = vmatpush1.msra.mxu0 0.0
        %1115 = vmatprep.subr.mxu0 0.0
        %1116 = vmatpush1.msra.mxu0 0.0
        %1117 = vmatprep.subr.mxu0 0.0
        %1118 = vmatpush1.msra.mxu0 0.0
        %1119 = vmatprep.subr.mxu0 0.0
        %1120 = vmatpush1.msra.mxu0 0.0
        %1121 = vmatprep.subr.mxu0 0.0
        %1122 = vmatpush1.msra.mxu0 0.0
        %1123 = vmatprep.subr.mxu0 0.0
        %1124 = vmatpush1.msra.mxu0 0.0
        %1125 = vmatprep.subr.mxu0 0.0
        %1126 = vmatpush1.msra.mxu0 0.0
        %1127 = vmatprep.subr.mxu0 0.0
        %1128 = vmatpush1.msra.mxu0 0.0
        %1129 = vmatprep.subr.mxu0 0.0
        %1130 = vmatpush1.msra.mxu0 0.0
        %1131 = vmatprep.subr.mxu0 0.0
        %1132 = vmatpush1.msra.mxu0 0.0
        %1133 = vmatprep.subr.mxu0 0.0
        %1134 = vmatpush1.msra.mxu0 0.0
        %1135 = vmatprep.subr.mxu0 0.0
        %1136 = vmatpush1.msra.mxu0 0.0
        %1137 = vmatprep.subr.mxu0 0.0
        %1138 = vmatpush1.msra.mxu0 0.0
        %1139 = vmatprep.subr.mxu0 0.0
        %1140 = vmatpush1.msra.mxu0 0.0
        %1141 = vmatprep.subr.mxu0 0.0
        %1142 = vmatpush1.msra.mxu0 0.0
        %1143 = vmatprep.subr.mxu0 0.0
        %1144 = vmatpush1.msra.mxu0 0.0
        %1145 = vmatprep.subr.mxu0 0.0
        %1146 = vmatpush1.msra.mxu0 0.0
        %1147 = vmatprep.subr.mxu0 0.0
        %1148 = vmatpush1.msra.mxu0 0.0
        %1149 = vmatprep.subr.mxu0 0.0
        %1150 = vmatpush1.msra.mxu0 0.0
        %1151 = vmatprep.subr.mxu0 0.0
        %1152 = vmatpush1.msra.mxu0 0.0
        %1153 = vmatprep.subr.mxu0 0.0
        %1154 = vmatpush1.msra.mxu0 0.0
        %1155 = vmatprep.mubr.f32.mxu0 0.0
        %v1156 = vand.u32 %v853, 4294901760
        %v1157 = vsub.f32 %v853, %v1156
        %v1158 = vand.u32 %v1157, 4294901760
        %1159 = vmatmul.mubr.f32.gmra.mrb[0].mxu0 %v1158
        %v1160 = vpop.f32.mrb[0].mxu0
        %v1161 = vadd.f32 %v1086, %v1160
        %v1162 = vpop.f32.mrb[0].mxu0
        %1163 = vdwg.mxu0
        %1164 = vmatprep.subr.mxu0 0.0
        %v1165 = vand.u32 %v192, 4294901760
        %v1166 = vsub.f32 %v192, %v1165
        %v1167 = vand.u32 %v1166, 4294901760
        %1168 = vmatpush1.msra.mxu0 %v1167
        %1169 = vmatprep.subr.mxu0 0.0
        %v1170 = vand.u32 %v280, 4294901760
        %v1171 = vsub.f32 %v280, %v1170
        %v1172 = vand.u32 %v1171, 4294901760
        %1173 = vmatpush1.msra.mxu0 %v1172
        %1174 = vmatprep.subr.mxu0 0.0
        %1175 = vmatpush1.msra.mxu0 0.0
        %1176 = vmatprep.subr.mxu0 0.0
        %1177 = vmatpush1.msra.mxu0 0.0
        %1178 = vmatprep.subr.mxu0 0.0
        %1179 = vmatpush1.msra.mxu0 0.0
        %1180 = vmatprep.subr.mxu0 0.0
        %1181 = vmatpush1.msra.mxu0 0.0
        %1182 = vmatprep.subr.mxu0 0.0
        %1183 = vmatpush1.msra.mxu0 0.0
        %1184 = vmatprep.subr.mxu0 0.0
        %1185 = vmatpush1.msra.mxu0 0.0
        %1186 = vmatprep.subr.mxu0 0.0
        %1187 = vmatpush1.msra.mxu0 0.0
        %1188 = vmatprep.subr.mxu0 0.0
        %1189 = vmatpush1.msra.mxu0 0.0
        %1190 = vmatprep.subr.mxu0 0.0
        %1191 = vmatpush1.msra.mxu0 0.0
        %1192 = vmatprep.subr.mxu0 0.0
        %1193 = vmatpush1.msra.mxu0 0.0
        %1194 = vmatprep.subr.mxu0 0.0
        %1195 = vmatpush1.msra.mxu0 0.0
        %1196 = vmatprep.subr.mxu0 0.0
        %1197 = vmatpush1.msra.mxu0 0.0
        %1198 = vmatprep.subr.mxu0 0.0
        %1199 = vmatpush1.msra.mxu0 0.0
        %1200 = vmatprep.subr.mxu0 0.0
        %1201 = vmatpush1.msra.mxu0 0.0
        %1202 = vmatprep.subr.mxu0 0.0
        %1203 = vmatpush1.msra.mxu0 0.0
        %1204 = vmatprep.subr.mxu0 0.0
        %1205 = vmatpush1.msra.mxu0 0.0
        %1206 = vmatprep.subr.mxu0 0.0
        %1207 = vmatpush1.msra.mxu0 0.0
        %1208 = vmatprep.subr.mxu0 0.0
        %1209 = vmatpush1.msra.mxu0 0.0
        %1210 = vmatprep.subr.mxu0 0.0
        %1211 = vmatpush1.msra.mxu0 0.0
        %1212 = vmatprep.subr.mxu0 0.0
        %1213 = vmatpush1.msra.mxu0 0.0
        %1214 = vmatprep.subr.mxu0 0.0
        %1215 = vmatpush1.msra.mxu0 0.0
        %1216 = vmatprep.subr.mxu0 0.0
        %1217 = vmatpush1.msra.mxu0 0.0
        %1218 = vmatprep.subr.mxu0 0.0
        %1219 = vmatpush1.msra.mxu0 0.0
        %1220 = vmatprep.subr.mxu0 0.0
        %1221 = vmatpush1.msra.mxu0 0.0
        %1222 = vmatprep.subr.mxu0 0.0
        %1223 = vmatpush1.msra.mxu0 0.0
        %1224 = vmatprep.subr.mxu0 0.0
        %1225 = vmatpush1.msra.mxu0 0.0
        %1226 = vmatprep.subr.mxu0 0.0
        %1227 = vmatpush1.msra.mxu0 0.0
        %1228 = vmatprep.subr.mxu0 0.0
        %1229 = vmatpush1.msra.mxu0 0.0
        %1230 = vmatprep.subr.mxu0 0.0
        %1231 = vmatpush1.msra.mxu0 0.0
        %1232 = vmatprep.subr.mxu0 0.0
        %1233 = vmatpush1.msra.mxu0 0.0
        %1234 = vmatprep.mubr.f32.mxu0 0.0
        %v1235 = vand.u32 %v853, 4294901760
        %1236 = vmatmul.mubr.f32.gmra.mrb[0].mxu0 %v1235
        %v1237 = vpop.f32.mrb[0].mxu0
        %v1238 = vadd.f32 %v1161, %v1237
        %v1239 = vpop.f32.mrb[0].mxu0
        %1240 = vdwg.mxu0
        %1241 = vmatprep.subr.mxu0 0.0
        %v1242 = vand.u32 %v192, 4294901760
        %1243 = vmatpush1.msra.mxu0 %v1242
        %1244 = vmatprep.subr.mxu0 0.0
        %v1245 = vand.u32 %v280, 4294901760
        %1246 = vmatpush1.msra.mxu0 %v1245
        %1247 = vmatprep.subr.mxu0 0.0
        %1248 = vmatpush1.msra.mxu0 0.0
        %1249 = vmatprep.subr.mxu0 0.0
        %1250 = vmatpush1.msra.mxu0 0.0
        %1251 = vmatprep.subr.mxu0 0.0
        %1252 = vmatpush1.msra.mxu0 0.0
        %1253 = vmatprep.subr.mxu0 0.0
        %1254 = vmatpush1.msra.mxu0 0.0
        %1255 = vmatprep.subr.mxu0 0.0
        %1256 = vmatpush1.msra.mxu0 0.0
        %1257 = vmatprep.subr.mxu0 0.0
        %1258 = vmatpush1.msra.mxu0 0.0
        %1259 = vmatprep.subr.mxu0 0.0
        %1260 = vmatpush1.msra.mxu0 0.0
        %1261 = vmatprep.subr.mxu0 0.0
        %1262 = vmatpush1.msra.mxu0 0.0
        %1263 = vmatprep.subr.mxu0 0.0
        %1264 = vmatpush1.msra.mxu0 0.0
        %1265 = vmatprep.subr.mxu0 0.0
        %1266 = vmatpush1.msra.mxu0 0.0
        %1267 = vmatprep.subr.mxu0 0.0
        %1268 = vmatpush1.msra.mxu0 0.0
        %1269 = vmatprep.subr.mxu0 0.0
        %1270 = vmatpush1.msra.mxu0 0.0
        %1271 = vmatprep.subr.mxu0 0.0
        %1272 = vmatpush1.msra.mxu0 0.0
        %1273 = vmatprep.subr.mxu0 0.0
        %1274 = vmatpush1.msra.mxu0 0.0
        %1275 = vmatprep.subr.mxu0 0.0
        %1276 = vmatpush1.msra.mxu0 0.0
        %1277 = vmatprep.subr.mxu0 0.0
        %1278 = vmatpush1.msra.mxu0 0.0
        %1279 = vmatprep.subr.mxu0 0.0
        %1280 = vmatpush1.msra.mxu0 0.0
        %1281 = vmatprep.subr.mxu0 0.0
        %1282 = vmatpush1.msra.mxu0 0.0
        %1283 = vmatprep.subr.mxu0 0.0
        %1284 = vmatpush1.msra.mxu0 0.0
        %1285 = vmatprep.subr.mxu0 0.0
        %1286 = vmatpush1.msra.mxu0 0.0
        %1287 = vmatprep.subr.mxu0 0.0
        %1288 = vmatpush1.msra.mxu0 0.0
        %1289 = vmatprep.subr.mxu0 0.0
        %1290 = vmatpush1.msra.mxu0 0.0
        %1291 = vmatprep.subr.mxu0 0.0
        %1292 = vmatpush1.msra.mxu0 0.0
        %1293 = vmatprep.subr.mxu0 0.0
        %1294 = vmatpush1.msra.mxu0 0.0
        %1295 = vmatprep.subr.mxu0 0.0
        %1296 = vmatpush1.msra.mxu0 0.0
        %1297 = vmatprep.subr.mxu0 0.0
        %1298 = vmatpush1.msra.mxu0 0.0
        %1299 = vmatprep.subr.mxu0 0.0
        %1300 = vmatpush1.msra.mxu0 0.0
        %1301 = vmatprep.subr.mxu0 0.0
        %1302 = vmatpush1.msra.mxu0 0.0
        %1303 = vmatprep.subr.mxu0 0.0
        %1304 = vmatpush1.msra.mxu0 0.0
        %1305 = vmatprep.subr.mxu0 0.0
        %1306 = vmatpush1.msra.mxu0 0.0
        %1307 = vmatprep.mubr.f32.mxu0 0.0
        %v1308 = vand.u32 %v853, 4294901760
        %1309 = vmatmul.mubr.f32.gmra.mrb[0].mxu0 %v1308
        %v1310 = vpop.f32.mrb[0].mxu0
        %v1311 = vadd.f32 %v1238, %v1310
        %v1312 = vpop.f32.mrb[0].mxu0
        %1313 = vdwg.mxu0
        %v1316 = vunpack.c.l.s4 1966171168
        %v1317 = vunpack.c.0.s8 %v1316
        %v1318 = vlaneseq
        %v1319 = vshrl.u32 %v1318, 7
        %v1320 = vsub.s32 %v1317, %v1319
        %v1321 = vrot.slane %v1311, %v1320
        %v1322 = vcombine.high %v1321, %v1321
        %v1324 = vunpack.c.l.s4 1966171168
        %v1325 = vunpack.c.0.s8 %v1324
        %v1326 = vlaneseq
        %v1327 = vshrl.u32 %v1326, 7
        %v1328 = vsub.s32 %v1325, %v1327
        %v1329 = vrot.slane %v1321, %v1328
        %v1331 = vunpack.c.l.s4 1966171168
        %v1332 = vunpack.c.0.s8 %v1331
        %v1333 = vlaneseq
        %v1334 = vshrl.u32 %v1333, 7
        %v1335 = vsub.s32 %v1332, %v1334
        %v1336 = vrot.slane %v1322, %v1335
        %v1337 = vcombine.high %v1329, %v1329
        %v1338 = vcombine.high %v1336, %v1336
        %1343 = vst.msk [vmem:[%s190 + $0x1] sm:$0x1] %vm770, %v1329
        %1344 = vst.msk [vmem:[%s190 + $0x9] sm:$0x1] %vm770, %v1336
        %1345 = vst.msk [vmem:[%s190 + $0x11] sm:$0x1] %vm770, %v1337
        %1346 = vst.msk [vmem:[%s190 + $0x19] sm:$0x1] %vm770, %v1338
        %v1347 = vld [vmem:[%s157 + $0x6] sm:$0x7]
        %v1348 = vld [vmem:[%s157 + $0x16] sm:$0x7]
        %v1349 = vld [vmem:[%s157 + $0x26] sm:$0x7]
        %v1350 = vld [vmem:[%s157 + $0x36] sm:$0x7]
        %v1355 = vrot.slane %v1347, 1
        %v1356 = vrot.slane %v1348, 1
        %v1357 = vrot.slane %v1349, 1
        %v1358 = vrot.slane %v1350, 1
        %v1363 = vmax.f32 %v1347, %v1355
        %v1364 = vmax.f32 %v1348, %v1356
        %v1365 = vmax.f32 %v1349, %v1357
        %v1366 = vmax.f32 %v1350, %v1358
        %v1367 = vrot.slane %v1347, 2
        %v1368 = vrot.slane %v1348, 2
        %v1369 = vrot.slane %v1349, 2
        %v1370 = vrot.slane %v1350, 2
        %v1375 = vmax.f32 %v1363, %v1367
        %v1376 = vmax.f32 %v1364, %v1368
        %v1377 = vmax.f32 %v1365, %v1369
        %v1378 = vmax.f32 %v1366, %v1370
        %1383 = vrot.lane.b32.xlu0 %v1375, 127
        %v1384 = vpop.permute.xlu0 %1383
        %1385 = vrot.lane.b32.xlu0 %v1376, 127
        %v1386 = vpop.permute.xlu0 %1385
        %1387 = vrot.lane.b32.xlu0 %v1377, 127
        %v1388 = vpop.permute.xlu0 %1387
        %1389 = vrot.lane.b32.xlu0 %v1378, 127
        %v1390 = vpop.permute.xlu0 %1389
        %v1395 = vmax.f32 %v1375, %v1384
        %v1396 = vmax.f32 %v1376, %v1386
        %v1397 = vmax.f32 %v1377, %v1388
        %v1398 = vmax.f32 %v1378, %v1390
        %1399 = vrot.lane.b32.xlu0 %v1375, 126
        %v1400 = vpop.permute.xlu0 %1399
        %1401 = vrot.lane.b32.xlu0 %v1376, 126
        %v1402 = vpop.permute.xlu0 %1401
        %1403 = vrot.lane.b32.xlu0 %v1377, 126
        %v1404 = vpop.permute.xlu0 %1403
        %1405 = vrot.lane.b32.xlu0 %v1378, 126
        %v1406 = vpop.permute.xlu0 %1405
        %v1411 = vmax.f32 %v1395, %v1400
        %v1412 = vmax.f32 %v1396, %v1402
        %v1413 = vmax.f32 %v1397, %v1404
        %v1414 = vmax.f32 %v1398, %v1406
        %v1419 = vrot.slane %v1412, 7
        %v1420 = vsel %vm267, %v1419, %v1411
        %v1421 = vrot.slane %v1413, 6
        %v1422 = vsel %vm270, %v1421, %v1420
        %v1423 = vrot.slane %v1414, 5
        %v1424 = vsel %vm273, %v1423, %v1422
        %v1425 = vsel %vm275, %v1424, 0
        %1427 = vmatprep.subr.mxu0 0.0
        %v1428 = vand.u32 %v192, 4294901760
        %1429 = vmatpush1.msra.mxu0 %v1428
        %1430 = vmatprep.subr.mxu0 0.0
        %v1431 = vand.u32 %v280, 4294901760
        %1432 = vmatpush1.msra.mxu0 %v1431
        %1433 = vmatprep.subr.mxu0 0.0
        %1434 = vmatpush1.msra.mxu0 0.0
        %1435 = vmatprep.subr.mxu0 0.0
        %1436 = vmatpush1.msra.mxu0 0.0
        %1437 = vmatprep.subr.mxu0 0.0
        %1438 = vmatpush1.msra.mxu0 0.0
        %1439 = vmatprep.subr.mxu0 0.0
        %1440 = vmatpush1.msra.mxu0 0.0
        %1441 = vmatprep.subr.mxu0 0.0
        %1442 = vmatpush1.msra.mxu0 0.0
        %1443 = vmatprep.subr.mxu0 0.0
        %1444 = vmatpush1.msra.mxu0 0.0
        %1445 = vmatprep.subr.mxu0 0.0
        %1446 = vmatpush1.msra.mxu0 0.0
        %1447 = vmatprep.subr.mxu0 0.0
        %1448 = vmatpush1.msra.mxu0 0.0
        %1449 = vmatprep.subr.mxu0 0.0
        %1450 = vmatpush1.msra.mxu0 0.0
        %1451 = vmatprep.subr.mxu0 0.0
        %1452 = vmatpush1.msra.mxu0 0.0
        %1453 = vmatprep.subr.mxu0 0.0
        %1454 = vmatpush1.msra.mxu0 0.0
        %1455 = vmatprep.subr.mxu0 0.0
        %1456 = vmatpush1.msra.mxu0 0.0
        %1457 = vmatprep.subr.mxu0 0.0
        %1458 = vmatpush1.msra.mxu0 0.0
        %1459 = vmatprep.subr.mxu0 0.0
        %1460 = vmatpush1.msra.mxu0 0.0
        %1461 = vmatprep.subr.mxu0 0.0
        %1462 = vmatpush1.msra.mxu0 0.0
        %1463 = vmatprep.subr.mxu0 0.0
        %1464 = vmatpush1.msra.mxu0 0.0
        %1465 = vmatprep.subr.mxu0 0.0
        %1466 = vmatpush1.msra.mxu0 0.0
        %1467 = vmatprep.subr.mxu0 0.0
        %1468 = vmatpush1.msra.mxu0 0.0
        %1469 = vmatprep.subr.mxu0 0.0
        %1470 = vmatpush1.msra.mxu0 0.0
        %1471 = vmatprep.subr.mxu0 0.0
        %1472 = vmatpush1.msra.mxu0 0.0
        %1473 = vmatprep.subr.mxu0 0.0
        %1474 = vmatpush1.msra.mxu0 0.0
        %1475 = vmatprep.subr.mxu0 0.0
        %1476 = vmatpush1.msra.mxu0 0.0
        %1477 = vmatprep.subr.mxu0 0.0
        %1478 = vmatpush1.msra.mxu0 0.0
        %1479 = vmatprep.subr.mxu0 0.0
        %1480 = vmatpush1.msra.mxu0 0.0
        %1481 = vmatprep.subr.mxu0 0.0
        %1482 = vmatpush1.msra.mxu0 0.0
        %1483 = vmatprep.subr.mxu0 0.0
        %1484 = vmatpush1.msra.mxu0 0.0
        %1485 = vmatprep.subr.mxu0 0.0
        %1486 = vmatpush1.msra.mxu0 0.0
        %1487 = vmatprep.subr.mxu0 0.0
        %1488 = vmatpush1.msra.mxu0 0.0
        %1489 = vmatprep.subr.mxu0 0.0
        %1490 = vmatpush1.msra.mxu0 0.0
        %1491 = vmatprep.subr.mxu0 0.0
        %1492 = vmatpush1.msra.mxu0 0.0
        %1493 = vmatprep.mubr.f32.mxu0 0.0
        %v1494 = vand.u32 %v1425, 4294901760
        %v1495 = vsub.f32 %v1425, %v1494
        %v1496 = vand.u32 %v1495, 4294901760
        %v1497 = vsub.f32 %v1495, %v1496
        %v1498 = vand.u32 %v1497, 4294901760
        %1499 = vmatmul.mubr.f32.gmra.mrb[0].mxu0 %v1498
        %v1500 = vpop.f32.mrb[0].mxu0
        %v1501 = vadd.f32 0.0, %v1500
        %v1502 = vpop.f32.mrb[0].mxu0
        %1503 = vdwg.mxu0
        %1504 = vmatprep.subr.mxu0 0.0
        %v1505 = vand.u32 %v192, 4294901760
        %v1506 = vsub.f32 %v192, %v1505
        %v1507 = vand.u32 %v1506, 4294901760
        %v1508 = vsub.f32 %v1506, %v1507
        %v1509 = vand.u32 %v1508, 4294901760
        %1510 = vmatpush1.msra.mxu0 %v1509
        %1511 = vmatprep.subr.mxu0 0.0
        %v1512 = vand.u32 %v280, 4294901760
        %v1513 = vsub.f32 %v280, %v1512
        %v1514 = vand.u32 %v1513, 4294901760
        %v1515 = vsub.f32 %v1513, %v1514
        %v1516 = vand.u32 %v1515, 4294901760
        %1517 = vmatpush1.msra.mxu0 %v1516
        %1518 = vmatprep.subr.mxu0 0.0
        %1519 = vmatpush1.msra.mxu0 0.0
        %1520 = vmatprep.subr.mxu0 0.0
        %1521 = vmatpush1.msra.mxu0 0.0
        %1522 = vmatprep.subr.mxu0 0.0
        %1523 = vmatpush1.msra.mxu0 0.0
        %1524 = vmatprep.subr.mxu0 0.0
        %1525 = vmatpush1.msra.mxu0 0.0
        %1526 = vmatprep.subr.mxu0 0.0
        %1527 = vmatpush1.msra.mxu0 0.0
        %1528 = vmatprep.subr.mxu0 0.0
        %1529 = vmatpush1.msra.mxu0 0.0
        %1530 = vmatprep.subr.mxu0 0.0
        %1531 = vmatpush1.msra.mxu0 0.0
        %1532 = vmatprep.subr.mxu0 0.0
        %1533 = vmatpush1.msra.mxu0 0.0
        %1534 = vmatprep.subr.mxu0 0.0
        %1535 = vmatpush1.msra.mxu0 0.0
        %1536 = vmatprep.subr.mxu0 0.0
        %1537 = vmatpush1.msra.mxu0 0.0
        %1538 = vmatprep.subr.mxu0 0.0
        %1539 = vmatpush1.msra.mxu0 0.0
        %1540 = vmatprep.subr.mxu0 0.0
        %1541 = vmatpush1.msra.mxu0 0.0
        %1542 = vmatprep.subr.mxu0 0.0
        %1543 = vmatpush1.msra.mxu0 0.0
        %1544 = vmatprep.subr.mxu0 0.0
        %1545 = vmatpush1.msra.mxu0 0.0
        %1546 = vmatprep.subr.mxu0 0.0
        %1547 = vmatpush1.msra.mxu0 0.0
        %1548 = vmatprep.subr.mxu0 0.0
        %1549 = vmatpush1.msra.mxu0 0.0
        %1550 = vmatprep.subr.mxu0 0.0
        %1551 = vmatpush1.msra.mxu0 0.0
        %1552 = vmatprep.subr.mxu0 0.0
        %1553 = vmatpush1.msra.mxu0 0.0
        %1554 = vmatprep.subr.mxu0 0.0
        %1555 = vmatpush1.msra.mxu0 0.0
        %1556 = vmatprep.subr.mxu0 0.0
        %1557 = vmatpush1.msra.mxu0 0.0
        %1558 = vmatprep.subr.mxu0 0.0
        %1559 = vmatpush1.msra.mxu0 0.0
        %1560 = vmatprep.subr.mxu0 0.0
        %1561 = vmatpush1.msra.mxu0 0.0
        %1562 = vmatprep.subr.mxu0 0.0
        %1563 = vmatpush1.msra.mxu0 0.0
        %1564 = vmatprep.subr.mxu0 0.0
        %1565 = vmatpush1.msra.mxu0 0.0
        %1566 = vmatprep.subr.mxu0 0.0
        %1567 = vmatpush1.msra.mxu0 0.0
        %1568 = vmatprep.subr.mxu0 0.0
        %1569 = vmatpush1.msra.mxu0 0.0
        %1570 = vmatprep.subr.mxu0 0.0
        %1571 = vmatpush1.msra.mxu0 0.0
        %1572 = vmatprep.subr.mxu0 0.0
        %1573 = vmatpush1.msra.mxu0 0.0
        %1574 = vmatprep.subr.mxu0 0.0
        %1575 = vmatpush1.msra.mxu0 0.0
        %1576 = vmatprep.subr.mxu0 0.0
        %1577 = vmatpush1.msra.mxu0 0.0
        %1578 = vmatprep.mubr.f32.mxu0 0.0
        %v1579 = vand.u32 %v1425, 4294901760
        %1580 = vmatmul.mubr.f32.gmra.mrb[0].mxu0 %v1579
        %v1581 = vpop.f32.mrb[0].mxu0
        %v1582 = vadd.f32 %v1501, %v1581
        %v1583 = vpop.f32.mrb[0].mxu0
        %1584 = vdwg.mxu0
        %1585 = vmatprep.subr.mxu0 0.0
        %v1586 = vand.u32 %v192, 4294901760
        %v1587 = vsub.f32 %v192, %v1586
        %1588 = vmatpush1.msra.mxu0 %v1587
        %1589 = vmatprep.subr.mxu0 0.0
        %v1590 = vand.u32 %v280, 4294901760
        %v1591 = vsub.f32 %v280, %v1590
        %1592 = vmatpush1.msra.mxu0 %v1591
        %1593 = vmatprep.subr.mxu0 0.0
        %1594 = vmatpush1.msra.mxu0 0.0
        %1595 = vmatprep.subr.mxu0 0.0
        %1596 = vmatpush1.msra.mxu0 0.0
        %1597 = vmatprep.subr.mxu0 0.0
        %1598 = vmatpush1.msra.mxu0 0.0
        %1599 = vmatprep.subr.mxu0 0.0
        %1600 = vmatpush1.msra.mxu0 0.0
        %1601 = vmatprep.subr.mxu0 0.0
        %1602 = vmatpush1.msra.mxu0 0.0
        %1603 = vmatprep.subr.mxu0 0.0
        %1604 = vmatpush1.msra.mxu0 0.0
        %1605 = vmatprep.subr.mxu0 0.0
        %1606 = vmatpush1.msra.mxu0 0.0
        %1607 = vmatprep.subr.mxu0 0.0
        %1608 = vmatpush1.msra.mxu0 0.0
        %1609 = vmatprep.subr.mxu0 0.0
        %1610 = vmatpush1.msra.mxu0 0.0
        %1611 = vmatprep.subr.mxu0 0.0
        %1612 = vmatpush1.msra.mxu0 0.0
        %1613 = vmatprep.subr.mxu0 0.0
        %1614 = vmatpush1.msra.mxu0 0.0
        %1615 = vmatprep.subr.mxu0 0.0
        %1616 = vmatpush1.msra.mxu0 0.0
        %1617 = vmatprep.subr.mxu0 0.0
        %1618 = vmatpush1.msra.mxu0 0.0
        %1619 = vmatprep.subr.mxu0 0.0
        %1620 = vmatpush1.msra.mxu0 0.0
        %1621 = vmatprep.subr.mxu0 0.0
        %1622 = vmatpush1.msra.mxu0 0.0
        %1623 = vmatprep.subr.mxu0 0.0
        %1624 = vmatpush1.msra.mxu0 0.0
        %1625 = vmatprep.subr.mxu0 0.0
        %1626 = vmatpush1.msra.mxu0 0.0
        %1627 = vmatprep.subr.mxu0 0.0
        %1628 = vmatpush1.msra.mxu0 0.0
        %1629 = vmatprep.subr.mxu0 0.0
        %1630 = vmatpush1.msra.mxu0 0.0
        %1631 = vmatprep.subr.mxu0 0.0
        %1632 = vmatpush1.msra.mxu0 0.0
        %1633 = vmatprep.subr.mxu0 0.0
        %1634 = vmatpush1.msra.mxu0 0.0
        %1635 = vmatprep.subr.mxu0 0.0
        %1636 = vmatpush1.msra.mxu0 0.0
        %1637 = vmatprep.subr.mxu0 0.0
        %1638 = vmatpush1.msra.mxu0 0.0
        %1639 = vmatprep.subr.mxu0 0.0
        %1640 = vmatpush1.msra.mxu0 0.0
        %1641 = vmatprep.subr.mxu0 0.0
        %1642 = vmatpush1.msra.mxu0 0.0
        %1643 = vmatprep.subr.mxu0 0.0
        %1644 = vmatpush1.msra.mxu0 0.0
        %1645 = vmatprep.subr.mxu0 0.0
        %1646 = vmatpush1.msra.mxu0 0.0
        %1647 = vmatprep.subr.mxu0 0.0
        %1648 = vmatpush1.msra.mxu0 0.0
        %1649 = vmatprep.subr.mxu0 0.0
        %1650 = vmatpush1.msra.mxu0 0.0
        %1651 = vmatprep.subr.mxu0 0.0
        %1652 = vmatpush1.msra.mxu0 0.0
        %1653 = vmatprep.mubr.f32.mxu0 0.0
        %v1654 = vand.u32 %v1425, 4294901760
        %v1655 = vsub.f32 %v1425, %v1654
        %1656 = vmatmul.mubr.f32.gmra.mrb[0].mxu0 %v1655
        %v1657 = vpop.f32.mrb[0].mxu0
        %v1658 = vadd.f32 %v1582, %v1657
        %v1659 = vpop.f32.mrb[0].mxu0
        %1660 = vdwg.mxu0
        %1661 = vmatprep.subr.mxu0 0.0
        %v1662 = vand.u32 %v192, 4294901760
        %1663 = vmatpush1.msra.mxu0 %v1662
        %1664 = vmatprep.subr.mxu0 0.0
        %v1665 = vand.u32 %v280, 4294901760
        %1666 = vmatpush1.msra.mxu0 %v1665
        %1667 = vmatprep.subr.mxu0 0.0
        %1668 = vmatpush1.msra.mxu0 0.0
        %1669 = vmatprep.subr.mxu0 0.0
        %1670 = vmatpush1.msra.mxu0 0.0
        %1671 = vmatprep.subr.mxu0 0.0
        %1672 = vmatpush1.msra.mxu0 0.0
        %1673 = vmatprep.subr.mxu0 0.0
        %1674 = vmatpush1.msra.mxu0 0.0
        %1675 = vmatprep.subr.mxu0 0.0
        %1676 = vmatpush1.msra.mxu0 0.0
        %1677 = vmatprep.subr.mxu0 0.0
        %1678 = vmatpush1.msra.mxu0 0.0
        %1679 = vmatprep.subr.mxu0 0.0
        %1680 = vmatpush1.msra.mxu0 0.0
        %1681 = vmatprep.subr.mxu0 0.0
        %1682 = vmatpush1.msra.mxu0 0.0
        %1683 = vmatprep.subr.mxu0 0.0
        %1684 = vmatpush1.msra.mxu0 0.0
        %1685 = vmatprep.subr.mxu0 0.0
        %1686 = vmatpush1.msra.mxu0 0.0
        %1687 = vmatprep.subr.mxu0 0.0
        %1688 = vmatpush1.msra.mxu0 0.0
        %1689 = vmatprep.subr.mxu0 0.0
        %1690 = vmatpush1.msra.mxu0 0.0
        %1691 = vmatprep.subr.mxu0 0.0
        %1692 = vmatpush1.msra.mxu0 0.0
        %1693 = vmatprep.subr.mxu0 0.0
        %1694 = vmatpush1.msra.mxu0 0.0
        %1695 = vmatprep.subr.mxu0 0.0
        %1696 = vmatpush1.msra.mxu0 0.0
        %1697 = vmatprep.subr.mxu0 0.0
        %1698 = vmatpush1.msra.mxu0 0.0
        %1699 = vmatprep.subr.mxu0 0.0
        %1700 = vmatpush1.msra.mxu0 0.0
        %1701 = vmatprep.subr.mxu0 0.0
        %1702 = vmatpush1.msra.mxu0 0.0
        %1703 = vmatprep.subr.mxu0 0.0
        %1704 = vmatpush1.msra.mxu0 0.0
        %1705 = vmatprep.subr.mxu0 0.0
        %1706 = vmatpush1.msra.mxu0 0.0
        %1707 = vmatprep.subr.mxu0 0.0
        %1708 = vmatpush1.msra.mxu0 0.0
        %1709 = vmatprep.subr.mxu0 0.0
        %1710 = vmatpush1.msra.mxu0 0.0
        %1711 = vmatprep.subr.mxu0 0.0
        %1712 = vmatpush1.msra.mxu0 0.0
        %1713 = vmatprep.subr.mxu0 0.0
        %1714 = vmatpush1.msra.mxu0 0.0
        %1715 = vmatprep.subr.mxu0 0.0
        %1716 = vmatpush1.msra.mxu0 0.0
        %1717 = vmatprep.subr.mxu0 0.0
        %1718 = vmatpush1.msra.mxu0 0.0
        %1719 = vmatprep.subr.mxu0 0.0
        %1720 = vmatpush1.msra.mxu0 0.0
        %1721 = vmatprep.subr.mxu0 0.0
        %1722 = vmatpush1.msra.mxu0 0.0
        %1723 = vmatprep.subr.mxu0 0.0
        %1724 = vmatpush1.msra.mxu0 0.0
        %1725 = vmatprep.subr.mxu0 0.0
        %1726 = vmatpush1.msra.mxu0 0.0
        %1727 = vmatprep.mubr.f32.mxu0 0.0
        %v1728 = vand.u32 %v1425, 4294901760
        %v1729 = vsub.f32 %v1425, %v1728
        %v1730 = vand.u32 %v1729, 4294901760
        %1731 = vmatmul.mubr.f32.gmra.mrb[0].mxu0 %v1730
        %v1732 = vpop.f32.mrb[0].mxu0
        %v1733 = vadd.f32 %v1658, %v1732
        %v1734 = vpop.f32.mrb[0].mxu0
        %1735 = vdwg.mxu0
        %1736 = vmatprep.subr.mxu0 0.0
        %v1737 = vand.u32 %v192, 4294901760
        %v1738 = vsub.f32 %v192, %v1737
        %v1739 = vand.u32 %v1738, 4294901760
        %1740 = vmatpush1.msra.mxu0 %v1739
        %1741 = vmatprep.subr.mxu0 0.0
        %v1742 = vand.u32 %v280, 4294901760
        %v1743 = vsub.f32 %v280, %v1742
        %v1744 = vand.u32 %v1743, 4294901760
        %1745 = vmatpush1.msra.mxu0 %v1744
        %1746 = vmatprep.subr.mxu0 0.0
        %1747 = vmatpush1.msra.mxu0 0.0
        %1748 = vmatprep.subr.mxu0 0.0
        %1749 = vmatpush1.msra.mxu0 0.0
        %1750 = vmatprep.subr.mxu0 0.0
        %1751 = vmatpush1.msra.mxu0 0.0
        %1752 = vmatprep.subr.mxu0 0.0
        %1753 = vmatpush1.msra.mxu0 0.0
        %1754 = vmatprep.subr.mxu0 0.0
        %1755 = vmatpush1.msra.mxu0 0.0
        %1756 = vmatprep.subr.mxu0 0.0
        %1757 = vmatpush1.msra.mxu0 0.0
        %1758 = vmatprep.subr.mxu0 0.0
        %1759 = vmatpush1.msra.mxu0 0.0
        %1760 = vmatprep.subr.mxu0 0.0
        %1761 = vmatpush1.msra.mxu0 0.0
        %1762 = vmatprep.subr.mxu0 0.0
        %1763 = vmatpush1.msra.mxu0 0.0
        %1764 = vmatprep.subr.mxu0 0.0
        %1765 = vmatpush1.msra.mxu0 0.0
        %1766 = vmatprep.subr.mxu0 0.0
        %1767 = vmatpush1.msra.mxu0 0.0
        %1768 = vmatprep.subr.mxu0 0.0
        %1769 = vmatpush1.msra.mxu0 0.0
        %1770 = vmatprep.subr.mxu0 0.0
        %1771 = vmatpush1.msra.mxu0 0.0
        %1772 = vmatprep.subr.mxu0 0.0
        %1773 = vmatpush1.msra.mxu0 0.0
        %1774 = vmatprep.subr.mxu0 0.0
        %1775 = vmatpush1.msra.mxu0 0.0
        %1776 = vmatprep.subr.mxu0 0.0
        %1777 = vmatpush1.msra.mxu0 0.0
        %1778 = vmatprep.subr.mxu0 0.0
        %1779 = vmatpush1.msra.mxu0 0.0
        %1780 = vmatprep.subr.mxu0 0.0
        %1781 = vmatpush1.msra.mxu0 0.0
        %1782 = vmatprep.subr.mxu0 0.0
        %1783 = vmatpush1.msra.mxu0 0.0
        %1784 = vmatprep.subr.mxu0 0.0
        %1785 = vmatpush1.msra.mxu0 0.0
        %1786 = vmatprep.subr.mxu0 0.0
        %1787 = vmatpush1.msra.mxu0 0.0
        %1788 = vmatprep.subr.mxu0 0.0
        %1789 = vmatpush1.msra.mxu0 0.0
        %1790 = vmatprep.subr.mxu0 0.0
        %1791 = vmatpush1.msra.mxu0 0.0
        %1792 = vmatprep.subr.mxu0 0.0
        %1793 = vmatpush1.msra.mxu0 0.0
        %1794 = vmatprep.subr.mxu0 0.0
        %1795 = vmatpush1.msra.mxu0 0.0
        %1796 = vmatprep.subr.mxu0 0.0
        %1797 = vmatpush1.msra.mxu0 0.0
        %1798 = vmatprep.subr.mxu0 0.0
        %1799 = vmatpush1.msra.mxu0 0.0
        %1800 = vmatprep.subr.mxu0 0.0
        %1801 = vmatpush1.msra.mxu0 0.0
        %1802 = vmatprep.subr.mxu0 0.0
        %1803 = vmatpush1.msra.mxu0 0.0
        %1804 = vmatprep.subr.mxu0 0.0
        %1805 = vmatpush1.msra.mxu0 0.0
        %1806 = vmatprep.mubr.f32.mxu0 0.0
        %v1807 = vand.u32 %v1425, 4294901760
        %1808 = vmatmul.mubr.f32.gmra.mrb[0].mxu0 %v1807
        %v1809 = vpop.f32.mrb[0].mxu0
        %v1810 = vadd.f32 %v1733, %v1809
        %v1811 = vpop.f32.mrb[0].mxu0
        %1812 = vdwg.mxu0
        %1813 = vmatprep.subr.mxu0 0.0
        %v1814 = vand.u32 %v192, 4294901760
        %1815 = vmatpush1.msra.mxu0 %v1814
        %1816 = vmatprep.subr.mxu0 0.0
        %v1817 = vand.u32 %v280, 4294901760
        %1818 = vmatpush1.msra.mxu0 %v1817
        %1819 = vmatprep.subr.mxu0 0.0
        %1820 = vmatpush1.msra.mxu0 0.0
        %1821 = vmatprep.subr.mxu0 0.0
        %1822 = vmatpush1.msra.mxu0 0.0
        %1823 = vmatprep.subr.mxu0 0.0
        %1824 = vmatpush1.msra.mxu0 0.0
        %1825 = vmatprep.subr.mxu0 0.0
        %1826 = vmatpush1.msra.mxu0 0.0
        %1827 = vmatprep.subr.mxu0 0.0
        %1828 = vmatpush1.msra.mxu0 0.0
        %1829 = vmatprep.subr.mxu0 0.0
        %1830 = vmatpush1.msra.mxu0 0.0
        %1831 = vmatprep.subr.mxu0 0.0
        %1832 = vmatpush1.msra.mxu0 0.0
        %1833 = vmatprep.subr.mxu0 0.0
        %1834 = vmatpush1.msra.mxu0 0.0
        %1835 = vmatprep.subr.mxu0 0.0
        %1836 = vmatpush1.msra.mxu0 0.0
        %1837 = vmatprep.subr.mxu0 0.0
        %1838 = vmatpush1.msra.mxu0 0.0
        %1839 = vmatprep.subr.mxu0 0.0
        %1840 = vmatpush1.msra.mxu0 0.0
        %1841 = vmatprep.subr.mxu0 0.0
        %1842 = vmatpush1.msra.mxu0 0.0
        %1843 = vmatprep.subr.mxu0 0.0
        %1844 = vmatpush1.msra.mxu0 0.0
        %1845 = vmatprep.subr.mxu0 0.0
        %1846 = vmatpush1.msra.mxu0 0.0
        %1847 = vmatprep.subr.mxu0 0.0
        %1848 = vmatpush1.msra.mxu0 0.0
        %1849 = vmatprep.subr.mxu0 0.0
        %1850 = vmatpush1.msra.mxu0 0.0
        %1851 = vmatprep.subr.mxu0 0.0
        %1852 = vmatpush1.msra.mxu0 0.0
        %1853 = vmatprep.subr.mxu0 0.0
        %1854 = vmatpush1.msra.mxu0 0.0
        %1855 = vmatprep.subr.mxu0 0.0
        %1856 = vmatpush1.msra.mxu0 0.0
        %1857 = vmatprep.subr.mxu0 0.0
        %1858 = vmatpush1.msra.mxu0 0.0
        %1859 = vmatprep.subr.mxu0 0.0
        %1860 = vmatpush1.msra.mxu0 0.0
        %1861 = vmatprep.subr.mxu0 0.0
        %1862 = vmatpush1.msra.mxu0 0.0
        %1863 = vmatprep.subr.mxu0 0.0
        %1864 = vmatpush1.msra.mxu0 0.0
        %1865 = vmatprep.subr.mxu0 0.0
        %1866 = vmatpush1.msra.mxu0 0.0
        %1867 = vmatprep.subr.mxu0 0.0
        %1868 = vmatpush1.msra.mxu0 0.0
        %1869 = vmatprep.subr.mxu0 0.0
        %1870 = vmatpush1.msra.mxu0 0.0
        %1871 = vmatprep.subr.mxu0 0.0
        %1872 = vmatpush1.msra.mxu0 0.0
        %1873 = vmatprep.subr.mxu0 0.0
        %1874 = vmatpush1.msra.mxu0 0.0
        %1875 = vmatprep.subr.mxu0 0.0
        %1876 = vmatpush1.msra.mxu0 0.0
        %1877 = vmatprep.subr.mxu0 0.0
        %1878 = vmatpush1.msra.mxu0 0.0
        %1879 = vmatprep.mubr.f32.mxu0 0.0
        %v1880 = vand.u32 %v1425, 4294901760
        %1881 = vmatmul.mubr.f32.gmra.mrb[0].mxu0 %v1880
        %v1882 = vpop.f32.mrb[0].mxu0
        %v1883 = vadd.f32 %v1810, %v1882
        %v1884 = vpop.f32.mrb[0].mxu0
        %1885 = vdwg.mxu0
        %v1888 = vunpack.c.l.s4 1966171168
        %v1889 = vunpack.c.0.s8 %v1888
        %v1890 = vlaneseq
        %v1891 = vshrl.u32 %v1890, 7
        %v1892 = vsub.s32 %v1889, %v1891
        %v1893 = vrot.slane %v1883, %v1892
        %v1894 = vcombine.high %v1893, %v1893
        %v1896 = vunpack.c.l.s4 1966171168
        %v1897 = vunpack.c.0.s8 %v1896
        %v1898 = vlaneseq
        %v1899 = vshrl.u32 %v1898, 7
        %v1900 = vsub.s32 %v1897, %v1899
        %v1901 = vrot.slane %v1893, %v1900
        %v1903 = vunpack.c.l.s4 1966171168
        %v1904 = vunpack.c.0.s8 %v1903
        %v1905 = vlaneseq
        %v1906 = vshrl.u32 %v1905, 7
        %v1907 = vsub.s32 %v1904, %v1906
        %v1908 = vrot.slane %v1894, %v1907
        %v1909 = vcombine.high %v1901, %v1901
        %v1910 = vcombine.high %v1908, %v1908
        %1915 = vst.msk [vmem:[%s190 + $0x2] sm:$0x1] %vm770, %v1901
        %1916 = vst.msk [vmem:[%s190 + $0xa] sm:$0x1] %vm770, %v1908
        %1917 = vst.msk [vmem:[%s190 + $0x12] sm:$0x1] %vm770, %v1909
        %1918 = vst.msk [vmem:[%s190 + $0x1a] sm:$0x1] %vm770, %v1910
        %v1919 = vld [vmem:[%s157 + $0x9] sm:$0x7]
        %v1920 = vld [vmem:[%s157 + $0x19] sm:$0x7]
        %v1921 = vld [vmem:[%s157 + $0x29] sm:$0x7]
        %v1922 = vld [vmem:[%s157 + $0x39] sm:$0x7]
        %v1927 = vrot.slane %v1919, 1
        %v1928 = vrot.slane %v1920, 1
        %v1929 = vrot.slane %v1921, 1
        %v1930 = vrot.slane %v1922, 1
        %v1935 = vmax.f32 %v1919, %v1927
        %v1936 = vmax.f32 %v1920, %v1928
        %v1937 = vmax.f32 %v1921, %v1929
        %v1938 = vmax.f32 %v1922, %v1930
        %v1939 = vrot.slane %v1919, 2
        %v1940 = vrot.slane %v1920, 2
        %v1941 = vrot.slane %v1921, 2
        %v1942 = vrot.slane %v1922, 2
        %v1947 = vmax.f32 %v1935, %v1939
        %v1948 = vmax.f32 %v1936, %v1940
        %v1949 = vmax.f32 %v1937, %v1941
        %v1950 = vmax.f32 %v1938, %v1942
        %1955 = vrot.lane.b32.xlu0 %v1947, 127
        %v1956 = vpop.permute.xlu0 %1955
        %1957 = vrot.lane.b32.xlu0 %v1948, 127
        %v1958 = vpop.permute.xlu0 %1957
        %1959 = vrot.lane.b32.xlu0 %v1949, 127
        %v1960 = vpop.permute.xlu0 %1959
        %1961 = vrot.lane.b32.xlu0 %v1950, 127
        %v1962 = vpop.permute.xlu0 %1961
        %v1967 = vmax.f32 %v1947, %v1956
        %v1968 = vmax.f32 %v1948, %v1958
        %v1969 = vmax.f32 %v1949, %v1960
        %v1970 = vmax.f32 %v1950, %v1962
        %1971 = vrot.lane.b32.xlu0 %v1947, 126
        %v1972 = vpop.permute.xlu0 %1971
        %1973 = vrot.lane.b32.xlu0 %v1948, 126
        %v1974 = vpop.permute.xlu0 %1973
        %1975 = vrot.lane.b32.xlu0 %v1949, 126
        %v1976 = vpop.permute.xlu0 %1975
        %1977 = vrot.lane.b32.xlu0 %v1950, 126
        %v1978 = vpop.permute.xlu0 %1977
        %v1983 = vmax.f32 %v1967, %v1972
        %v1984 = vmax.f32 %v1968, %v1974
        %v1985 = vmax.f32 %v1969, %v1976
        %v1986 = vmax.f32 %v1970, %v1978
        %v1991 = vrot.slane %v1984, 7
        %v1992 = vsel %vm267, %v1991, %v1983
        %v1993 = vrot.slane %v1985, 6
        %v1994 = vsel %vm270, %v1993, %v1992
        %v1995 = vrot.slane %v1986, 5
        %v1996 = vsel %vm273, %v1995, %v1994
        %v1997 = vsel %vm275, %v1996, 0
        %1999 = vmatprep.subr.mxu0 0.0
        %v2000 = vand.u32 %v192, 4294901760
        %2001 = vmatpush1.msra.mxu0 %v2000
        %2002 = vmatprep.subr.mxu0 0.0
        %v2003 = vand.u32 %v280, 4294901760
        %2004 = vmatpush1.msra.mxu0 %v2003
        %2005 = vmatprep.subr.mxu0 0.0
        %2006 = vmatpush1.msra.mxu0 0.0
        %2007 = vmatprep.subr.mxu0 0.0
        %2008 = vmatpush1.msra.mxu0 0.0
        %2009 = vmatprep.subr.mxu0 0.0
        %2010 = vmatpush1.msra.mxu0 0.0
        %2011 = vmatprep.subr.mxu0 0.0
        %2012 = vmatpush1.msra.mxu0 0.0
        %2013 = vmatprep.subr.mxu0 0.0
        %2014 = vmatpush1.msra.mxu0 0.0
        %2015 = vmatprep.subr.mxu0 0.0
        %2016 = vmatpush1.msra.mxu0 0.0
        %2017 = vmatprep.subr.mxu0 0.0
        %2018 = vmatpush1.msra.mxu0 0.0
        %2019 = vmatprep.subr.mxu0 0.0
        %2020 = vmatpush1.msra.mxu0 0.0
        %2021 = vmatprep.subr.mxu0 0.0
        %2022 = vmatpush1.msra.mxu0 0.0
        %2023 = vmatprep.subr.mxu0 0.0
        %2024 = vmatpush1.msra.mxu0 0.0
        %2025 = vmatprep.subr.mxu0 0.0
        %2026 = vmatpush1.msra.mxu0 0.0
        %2027 = vmatprep.subr.mxu0 0.0
        %2028 = vmatpush1.msra.mxu0 0.0
        %2029 = vmatprep.subr.mxu0 0.0
        %2030 = vmatpush1.msra.mxu0 0.0
        %2031 = vmatprep.subr.mxu0 0.0
        %2032 = vmatpush1.msra.mxu0 0.0
        %2033 = vmatprep.subr.mxu0 0.0
        %2034 = vmatpush1.msra.mxu0 0.0
        %2035 = vmatprep.subr.mxu0 0.0
        %2036 = vmatpush1.msra.mxu0 0.0
        %2037 = vmatprep.subr.mxu0 0.0
        %2038 = vmatpush1.msra.mxu0 0.0
        %2039 = vmatprep.subr.mxu0 0.0
        %2040 = vmatpush1.msra.mxu0 0.0
        %2041 = vmatprep.subr.mxu0 0.0
        %2042 = vmatpush1.msra.mxu0 0.0
        %2043 = vmatprep.subr.mxu0 0.0
        %2044 = vmatpush1.msra.mxu0 0.0
        %2045 = vmatprep.subr.mxu0 0.0
        %2046 = vmatpush1.msra.mxu0 0.0
        %2047 = vmatprep.subr.mxu0 0.0
        %2048 = vmatpush1.msra.mxu0 0.0
        %2049 = vmatprep.subr.mxu0 0.0
        %2050 = vmatpush1.msra.mxu0 0.0
        %2051 = vmatprep.subr.mxu0 0.0
        %2052 = vmatpush1.msra.mxu0 0.0
        %2053 = vmatprep.subr.mxu0 0.0
        %2054 = vmatpush1.msra.mxu0 0.0
        %2055 = vmatprep.subr.mxu0 0.0
        %2056 = vmatpush1.msra.mxu0 0.0
        %2057 = vmatprep.subr.mxu0 0.0
        %2058 = vmatpush1.msra.mxu0 0.0
        %2059 = vmatprep.subr.mxu0 0.0
        %2060 = vmatpush1.msra.mxu0 0.0
        %2061 = vmatprep.subr.mxu0 0.0
        %2062 = vmatpush1.msra.mxu0 0.0
        %2063 = vmatprep.subr.mxu0 0.0
        %2064 = vmatpush1.msra.mxu0 0.0
        %2065 = vmatprep.mubr.f32.mxu0 0.0
        %v2066 = vand.u32 %v1997, 4294901760
        %v2067 = vsub.f32 %v1997, %v2066
        %v2068 = vand.u32 %v2067, 4294901760
        %v2069 = vsub.f32 %v2067, %v2068
        %v2070 = vand.u32 %v2069, 4294901760
        %2071 = vmatmul.mubr.f32.gmra.mrb[0].mxu0 %v2070
        %v2072 = vpop.f32.mrb[0].mxu0
        %v2073 = vadd.f32 0.0, %v2072
        %v2074 = vpop.f32.mrb[0].mxu0
        %2075 = vdwg.mxu0
        %2076 = vmatprep.subr.mxu0 0.0
        %v2077 = vand.u32 %v192, 4294901760
        %v2078 = vsub.f32 %v192, %v2077
        %v2079 = vand.u32 %v2078, 4294901760
        %v2080 = vsub.f32 %v2078, %v2079
        %v2081 = vand.u32 %v2080, 4294901760
        %2082 = vmatpush1.msra.mxu0 %v2081
        %2083 = vmatprep.subr.mxu0 0.0
        %v2084 = vand.u32 %v280, 4294901760
        %v2085 = vsub.f32 %v280, %v2084
        %v2086 = vand.u32 %v2085, 4294901760
        %v2087 = vsub.f32 %v2085, %v2086
        %v2088 = vand.u32 %v2087, 4294901760
        %2089 = vmatpush1.msra.mxu0 %v2088
        %2090 = vmatprep.subr.mxu0 0.0
        %2091 = vmatpush1.msra.mxu0 0.0
        %2092 = vmatprep.subr.mxu0 0.0
        %2093 = vmatpush1.msra.mxu0 0.0
        %2094 = vmatprep.subr.mxu0 0.0
        %2095 = vmatpush1.msra.mxu0 0.0
        %2096 = vmatprep.subr.mxu0 0.0
        %2097 = vmatpush1.msra.mxu0 0.0
        %2098 = vmatprep.subr.mxu0 0.0
        %2099 = vmatpush1.msra.mxu0 0.0
        %2100 = vmatprep.subr.mxu0 0.0
        %2101 = vmatpush1.msra.mxu0 0.0
        %2102 = vmatprep.subr.mxu0 0.0
        %2103 = vmatpush1.msra.mxu0 0.0
        %2104 = vmatprep.subr.mxu0 0.0
        %2105 = vmatpush1.msra.mxu0 0.0
        %2106 = vmatprep.subr.mxu0 0.0
        %2107 = vmatpush1.msra.mxu0 0.0
        %2108 = vmatprep.subr.mxu0 0.0
        %2109 = vmatpush1.msra.mxu0 0.0
        %2110 = vmatprep.subr.mxu0 0.0
        %2111 = vmatpush1.msra.mxu0 0.0
        %2112 = vmatprep.subr.mxu0 0.0
        %2113 = vmatpush1.msra.mxu0 0.0
        %2114 = vmatprep.subr.mxu0 0.0
        %2115 = vmatpush1.msra.mxu0 0.0
        %2116 = vmatprep.subr.mxu0 0.0
        %2117 = vmatpush1.msra.mxu0 0.0
        %2118 = vmatprep.subr.mxu0 0.0
        %2119 = vmatpush1.msra.mxu0 0.0
        %2120 = vmatprep.subr.mxu0 0.0
        %2121 = vmatpush1.msra.mxu0 0.0
        %2122 = vmatprep.subr.mxu0 0.0
        %2123 = vmatpush1.msra.mxu0 0.0
        %2124 = vmatprep.subr.mxu0 0.0
        %2125 = vmatpush1.msra.mxu0 0.0
        %2126 = vmatprep.subr.mxu0 0.0
        %2127 = vmatpush1.msra.mxu0 0.0
        %2128 = vmatprep.subr.mxu0 0.0
        %2129 = vmatpush1.msra.mxu0 0.0
        %2130 = vmatprep.subr.mxu0 0.0
        %2131 = vmatpush1.msra.mxu0 0.0
        %2132 = vmatprep.subr.mxu0 0.0
        %2133 = vmatpush1.msra.mxu0 0.0
        %2134 = vmatprep.subr.mxu0 0.0
        %2135 = vmatpush1.msra.mxu0 0.0
        %2136 = vmatprep.subr.mxu0 0.0
        %2137 = vmatpush1.msra.mxu0 0.0
        %2138 = vmatprep.subr.mxu0 0.0
        %2139 = vmatpush1.msra.mxu0 0.0
        %2140 = vmatprep.subr.mxu0 0.0
        %2141 = vmatpush1.msra.mxu0 0.0
        %2142 = vmatprep.subr.mxu0 0.0
        %2143 = vmatpush1.msra.mxu0 0.0
        %2144 = vmatprep.subr.mxu0 0.0
        %2145 = vmatpush1.msra.mxu0 0.0
        %2146 = vmatprep.subr.mxu0 0.0
        %2147 = vmatpush1.msra.mxu0 0.0
        %2148 = vmatprep.subr.mxu0 0.0
        %2149 = vmatpush1.msra.mxu0 0.0
        %2150 = vmatprep.mubr.f32.mxu0 0.0
        %v2151 = vand.u32 %v1997, 4294901760
        %2152 = vmatmul.mubr.f32.gmra.mrb[0].mxu0 %v2151
        %v2153 = vpop.f32.mrb[0].mxu0
        %v2154 = vadd.f32 %v2073, %v2153
        %v2155 = vpop.f32.mrb[0].mxu0
        %2156 = vdwg.mxu0
        %2157 = vmatprep.subr.mxu0 0.0
        %v2158 = vand.u32 %v192, 4294901760
        %v2159 = vsub.f32 %v192, %v2158
        %2160 = vmatpush1.msra.mxu0 %v2159
        %2161 = vmatprep.subr.mxu0 0.0
        %v2162 = vand.u32 %v280, 4294901760
        %v2163 = vsub.f32 %v280, %v2162
        %2164 = vmatpush1.msra.mxu0 %v2163
        %2165 = vmatprep.subr.mxu0 0.0
        %2166 = vmatpush1.msra.mxu0 0.0
        %2167 = vmatprep.subr.mxu0 0.0
        %2168 = vmatpush1.msra.mxu0 0.0
        %2169 = vmatprep.subr.mxu0 0.0
        %2170 = vmatpush1.msra.mxu0 0.0
        %2171 = vmatprep.subr.mxu0 0.0
        %2172 = vmatpush1.msra.mxu0 0.0
        %2173 = vmatprep.subr.mxu0 0.0
        %2174 = vmatpush1.msra.mxu0 0.0
        %2175 = vmatprep.subr.mxu0 0.0
        %2176 = vmatpush1.msra.mxu0 0.0
        %2177 = vmatprep.subr.mxu0 0.0
        %2178 = vmatpush1.msra.mxu0 0.0
        %2179 = vmatprep.subr.mxu0 0.0
        %2180 = vmatpush1.msra.mxu0 0.0
        %2181 = vmatprep.subr.mxu0 0.0
        %2182 = vmatpush1.msra.mxu0 0.0
        %2183 = vmatprep.subr.mxu0 0.0
        %2184 = vmatpush1.msra.mxu0 0.0
        %2185 = vmatprep.subr.mxu0 0.0
        %2186 = vmatpush1.msra.mxu0 0.0
        %2187 = vmatprep.subr.mxu0 0.0
        %2188 = vmatpush1.msra.mxu0 0.0
        %2189 = vmatprep.subr.mxu0 0.0
        %2190 = vmatpush1.msra.mxu0 0.0
        %2191 = vmatprep.subr.mxu0 0.0
        %2192 = vmatpush1.msra.mxu0 0.0
        %2193 = vmatprep.subr.mxu0 0.0
        %2194 = vmatpush1.msra.mxu0 0.0
        %2195 = vmatprep.subr.mxu0 0.0
        %2196 = vmatpush1.msra.mxu0 0.0
        %2197 = vmatprep.subr.mxu0 0.0
        %2198 = vmatpush1.msra.mxu0 0.0
        %2199 = vmatprep.subr.mxu0 0.0
        %2200 = vmatpush1.msra.mxu0 0.0
        %2201 = vmatprep.subr.mxu0 0.0
        %2202 = vmatpush1.msra.mxu0 0.0
        %2203 = vmatprep.subr.mxu0 0.0
        %2204 = vmatpush1.msra.mxu0 0.0
        %2205 = vmatprep.subr.mxu0 0.0
        %2206 = vmatpush1.msra.mxu0 0.0
        %2207 = vmatprep.subr.mxu0 0.0
        %2208 = vmatpush1.msra.mxu0 0.0
        %2209 = vmatprep.subr.mxu0 0.0
        %2210 = vmatpush1.msra.mxu0 0.0
        %2211 = vmatprep.subr.mxu0 0.0
        %2212 = vmatpush1.msra.mxu0 0.0
        %2213 = vmatprep.subr.mxu0 0.0
        %2214 = vmatpush1.msra.mxu0 0.0
        %2215 = vmatprep.subr.mxu0 0.0
        %2216 = vmatpush1.msra.mxu0 0.0
        %2217 = vmatprep.subr.mxu0 0.0
        %2218 = vmatpush1.msra.mxu0 0.0
        %2219 = vmatprep.subr.mxu0 0.0
        %2220 = vmatpush1.msra.mxu0 0.0
        %2221 = vmatprep.subr.mxu0 0.0
        %2222 = vmatpush1.msra.mxu0 0.0
        %2223 = vmatprep.subr.mxu0 0.0
        %2224 = vmatpush1.msra.mxu0 0.0
        %2225 = vmatprep.mubr.f32.mxu0 0.0
        %v2226 = vand.u32 %v1997, 4294901760
        %v2227 = vsub.f32 %v1997, %v2226
        %2228 = vmatmul.mubr.f32.gmra.mrb[0].mxu0 %v2227
        %v2229 = vpop.f32.mrb[0].mxu0
        %v2230 = vadd.f32 %v2154, %v2229
        %v2231 = vpop.f32.mrb[0].mxu0
        %2232 = vdwg.mxu0
        %2233 = vmatprep.subr.mxu0 0.0
        %v2234 = vand.u32 %v192, 4294901760
        %2235 = vmatpush1.msra.mxu0 %v2234
        %2236 = vmatprep.subr.mxu0 0.0
        %v2237 = vand.u32 %v280, 4294901760
        %2238 = vmatpush1.msra.mxu0 %v2237
        %2239 = vmatprep.subr.mxu0 0.0
        %2240 = vmatpush1.msra.mxu0 0.0
        %2241 = vmatprep.subr.mxu0 0.0
        %2242 = vmatpush1.msra.mxu0 0.0
        %2243 = vmatprep.subr.mxu0 0.0
        %2244 = vmatpush1.msra.mxu0 0.0
        %2245 = vmatprep.subr.mxu0 0.0
        %2246 = vmatpush1.msra.mxu0 0.0
        %2247 = vmatprep.subr.mxu0 0.0
        %2248 = vmatpush1.msra.mxu0 0.0
        %2249 = vmatprep.subr.mxu0 0.0
        %2250 = vmatpush1.msra.mxu0 0.0
        %2251 = vmatprep.subr.mxu0 0.0
        %2252 = vmatpush1.msra.mxu0 0.0
        %2253 = vmatprep.subr.mxu0 0.0
        %2254 = vmatpush1.msra.mxu0 0.0
        %2255 = vmatprep.subr.mxu0 0.0
        %2256 = vmatpush1.msra.mxu0 0.0
        %2257 = vmatprep.subr.mxu0 0.0
        %2258 = vmatpush1.msra.mxu0 0.0
        %2259 = vmatprep.subr.mxu0 0.0
        %2260 = vmatpush1.msra.mxu0 0.0
        %2261 = vmatprep.subr.mxu0 0.0
        %2262 = vmatpush1.msra.mxu0 0.0
        %2263 = vmatprep.subr.mxu0 0.0
        %2264 = vmatpush1.msra.mxu0 0.0
        %2265 = vmatprep.subr.mxu0 0.0
        %2266 = vmatpush1.msra.mxu0 0.0
        %2267 = vmatprep.subr.mxu0 0.0
        %2268 = vmatpush1.msra.mxu0 0.0
        %2269 = vmatprep.subr.mxu0 0.0
        %2270 = vmatpush1.msra.mxu0 0.0
        %2271 = vmatprep.subr.mxu0 0.0
        %2272 = vmatpush1.msra.mxu0 0.0
        %2273 = vmatprep.subr.mxu0 0.0
        %2274 = vmatpush1.msra.mxu0 0.0
        %2275 = vmatprep.subr.mxu0 0.0
        %2276 = vmatpush1.msra.mxu0 0.0
        %2277 = vmatprep.subr.mxu0 0.0
        %2278 = vmatpush1.msra.mxu0 0.0
        %2279 = vmatprep.subr.mxu0 0.0
        %2280 = vmatpush1.msra.mxu0 0.0
        %2281 = vmatprep.subr.mxu0 0.0
        %2282 = vmatpush1.msra.mxu0 0.0
        %2283 = vmatprep.subr.mxu0 0.0
        %2284 = vmatpush1.msra.mxu0 0.0
        %2285 = vmatprep.subr.mxu0 0.0
        %2286 = vmatpush1.msra.mxu0 0.0
        %2287 = vmatprep.subr.mxu0 0.0
        %2288 = vmatpush1.msra.mxu0 0.0
        %2289 = vmatprep.subr.mxu0 0.0
        %2290 = vmatpush1.msra.mxu0 0.0
        %2291 = vmatprep.subr.mxu0 0.0
        %2292 = vmatpush1.msra.mxu0 0.0
        %2293 = vmatprep.subr.mxu0 0.0
        %2294 = vmatpush1.msra.mxu0 0.0
        %2295 = vmatprep.subr.mxu0 0.0
        %2296 = vmatpush1.msra.mxu0 0.0
        %2297 = vmatprep.subr.mxu0 0.0
        %2298 = vmatpush1.msra.mxu0 0.0
        %2299 = vmatprep.mubr.f32.mxu0 0.0
        %v2300 = vand.u32 %v1997, 4294901760
        %v2301 = vsub.f32 %v1997, %v2300
        %v2302 = vand.u32 %v2301, 4294901760
        %2303 = vmatmul.mubr.f32.gmra.mrb[0].mxu0 %v2302
        %v2304 = vpop.f32.mrb[0].mxu0
        %v2305 = vadd.f32 %v2230, %v2304
        %v2306 = vpop.f32.mrb[0].mxu0
        %2307 = vdwg.mxu0
        %2308 = vmatprep.subr.mxu0 0.0
        %v2309 = vand.u32 %v192, 4294901760
        %v2310 = vsub.f32 %v192, %v2309
        %v2311 = vand.u32 %v2310, 4294901760
        %2312 = vmatpush1.msra.mxu0 %v2311
        %2313 = vmatprep.subr.mxu0 0.0
        %v2314 = vand.u32 %v280, 4294901760
        %v2315 = vsub.f32 %v280, %v2314
        %v2316 = vand.u32 %v2315, 4294901760
        %2317 = vmatpush1.msra.mxu0 %v2316
        %2318 = vmatprep.subr.mxu0 0.0
        %2319 = vmatpush1.msra.mxu0 0.0
        %2320 = vmatprep.subr.mxu0 0.0
        %2321 = vmatpush1.msra.mxu0 0.0
        %2322 = vmatprep.subr.mxu0 0.0
        %2323 = vmatpush1.msra.mxu0 0.0
        %2324 = vmatprep.subr.mxu0 0.0
        %2325 = vmatpush1.msra.mxu0 0.0
        %2326 = vmatprep.subr.mxu0 0.0
        %2327 = vmatpush1.msra.mxu0 0.0
        %2328 = vmatprep.subr.mxu0 0.0
        %2329 = vmatpush1.msra.mxu0 0.0
        %2330 = vmatprep.subr.mxu0 0.0
        %2331 = vmatpush1.msra.mxu0 0.0
        %2332 = vmatprep.subr.mxu0 0.0
        %2333 = vmatpush1.msra.mxu0 0.0
        %2334 = vmatprep.subr.mxu0 0.0
        %2335 = vmatpush1.msra.mxu0 0.0
        %2336 = vmatprep.subr.mxu0 0.0
        %2337 = vmatpush1.msra.mxu0 0.0
        %2338 = vmatprep.subr.mxu0 0.0
        %2339 = vmatpush1.msra.mxu0 0.0
        %2340 = vmatprep.subr.mxu0 0.0
        %2341 = vmatpush1.msra.mxu0 0.0
        %2342 = vmatprep.subr.mxu0 0.0
        %2343 = vmatpush1.msra.mxu0 0.0
        %2344 = vmatprep.subr.mxu0 0.0
        %2345 = vmatpush1.msra.mxu0 0.0
        %2346 = vmatprep.subr.mxu0 0.0
        %2347 = vmatpush1.msra.mxu0 0.0
        %2348 = vmatprep.subr.mxu0 0.0
        %2349 = vmatpush1.msra.mxu0 0.0
        %2350 = vmatprep.subr.mxu0 0.0
        %2351 = vmatpush1.msra.mxu0 0.0
        %2352 = vmatprep.subr.mxu0 0.0
        %2353 = vmatpush1.msra.mxu0 0.0
        %2354 = vmatprep.subr.mxu0 0.0
        %2355 = vmatpush1.msra.mxu0 0.0
        %2356 = vmatprep.subr.mxu0 0.0
        %2357 = vmatpush1.msra.mxu0 0.0
        %2358 = vmatprep.subr.mxu0 0.0
        %2359 = vmatpush1.msra.mxu0 0.0
        %2360 = vmatprep.subr.mxu0 0.0
        %2361 = vmatpush1.msra.mxu0 0.0
        %2362 = vmatprep.subr.mxu0 0.0
        %2363 = vmatpush1.msra.mxu0 0.0
        %2364 = vmatprep.subr.mxu0 0.0
        %2365 = vmatpush1.msra.mxu0 0.0
        %2366 = vmatprep.subr.mxu0 0.0
        %2367 = vmatpush1.msra.mxu0 0.0
        %2368 = vmatprep.subr.mxu0 0.0
        %2369 = vmatpush1.msra.mxu0 0.0
        %2370 = vmatprep.subr.mxu0 0.0
        %2371 = vmatpush1.msra.mxu0 0.0
        %2372 = vmatprep.subr.mxu0 0.0
        %2373 = vmatpush1.msra.mxu0 0.0
        %2374 = vmatprep.subr.mxu0 0.0
        %2375 = vmatpush1.msra.mxu0 0.0
        %2376 = vmatprep.subr.mxu0 0.0
        %2377 = vmatpush1.msra.mxu0 0.0
        %2378 = vmatprep.mubr.f32.mxu0 0.0
        %v2379 = vand.u32 %v1997, 4294901760
        %2380 = vmatmul.mubr.f32.gmra.mrb[0].mxu0 %v2379
        %v2381 = vpop.f32.mrb[0].mxu0
        %v2382 = vadd.f32 %v2305, %v2381
        %v2383 = vpop.f32.mrb[0].mxu0
        %2384 = vdwg.mxu0
        %2385 = vmatprep.subr.mxu0 0.0
        %v2386 = vand.u32 %v192, 4294901760
        %2387 = vmatpush1.msra.mxu0 %v2386
        %2388 = vmatprep.subr.mxu0 0.0
        %v2389 = vand.u32 %v280, 4294901760
        %2390 = vmatpush1.msra.mxu0 %v2389
        %2391 = vmatprep.subr.mxu0 0.0
        %2392 = vmatpush1.msra.mxu0 0.0
        %2393 = vmatprep.subr.mxu0 0.0
        %2394 = vmatpush1.msra.mxu0 0.0
        %2395 = vmatprep.subr.mxu0 0.0
        %2396 = vmatpush1.msra.mxu0 0.0
        %2397 = vmatprep.subr.mxu0 0.0
        %2398 = vmatpush1.msra.mxu0 0.0
        %2399 = vmatprep.subr.mxu0 0.0
        %2400 = vmatpush1.msra.mxu0 0.0
        %2401 = vmatprep.subr.mxu0 0.0
        %2402 = vmatpush1.msra.mxu0 0.0
        %2403 = vmatprep.subr.mxu0 0.0
        %2404 = vmatpush1.msra.mxu0 0.0
        %2405 = vmatprep.subr.mxu0 0.0
        %2406 = vmatpush1.msra.mxu0 0.0
        %2407 = vmatprep.subr.mxu0 0.0
        %2408 = vmatpush1.msra.mxu0 0.0
        %2409 = vmatprep.subr.mxu0 0.0
        %2410 = vmatpush1.msra.mxu0 0.0
        %2411 = vmatprep.subr.mxu0 0.0
        %2412 = vmatpush1.msra.mxu0 0.0
        %2413 = vmatprep.subr.mxu0 0.0
        %2414 = vmatpush1.msra.mxu0 0.0
        %2415 = vmatprep.subr.mxu0 0.0
        %2416 = vmatpush1.msra.mxu0 0.0
        %2417 = vmatprep.subr.mxu0 0.0
        %2418 = vmatpush1.msra.mxu0 0.0
        %2419 = vmatprep.subr.mxu0 0.0
        %2420 = vmatpush1.msra.mxu0 0.0
        %2421 = vmatprep.subr.mxu0 0.0
        %2422 = vmatpush1.msra.mxu0 0.0
        %2423 = vmatprep.subr.mxu0 0.0
        %2424 = vmatpush1.msra.mxu0 0.0
        %2425 = vmatprep.subr.mxu0 0.0
        %2426 = vmatpush1.msra.mxu0 0.0
        %2427 = vmatprep.subr.mxu0 0.0
        %2428 = vmatpush1.msra.mxu0 0.0
        %2429 = vmatprep.subr.mxu0 0.0
        %2430 = vmatpush1.msra.mxu0 0.0
        %2431 = vmatprep.subr.mxu0 0.0
        %2432 = vmatpush1.msra.mxu0 0.0
        %2433 = vmatprep.subr.mxu0 0.0
        %2434 = vmatpush1.msra.mxu0 0.0
        %2435 = vmatprep.subr.mxu0 0.0
        %2436 = vmatpush1.msra.mxu0 0.0
        %2437 = vmatprep.subr.mxu0 0.0
        %2438 = vmatpush1.msra.mxu0 0.0
        %2439 = vmatprep.subr.mxu0 0.0
        %2440 = vmatpush1.msra.mxu0 0.0
        %2441 = vmatprep.subr.mxu0 0.0
        %2442 = vmatpush1.msra.mxu0 0.0
        %2443 = vmatprep.subr.mxu0 0.0
        %2444 = vmatpush1.msra.mxu0 0.0
        %2445 = vmatprep.subr.mxu0 0.0
        %2446 = vmatpush1.msra.mxu0 0.0
        %2447 = vmatprep.subr.mxu0 0.0
        %2448 = vmatpush1.msra.mxu0 0.0
        %2449 = vmatprep.subr.mxu0 0.0
        %2450 = vmatpush1.msra.mxu0 0.0
        %2451 = vmatprep.mubr.f32.mxu0 0.0
        %v2452 = vand.u32 %v1997, 4294901760
        %2453 = vmatmul.mubr.f32.gmra.mrb[0].mxu0 %v2452
        %v2454 = vpop.f32.mrb[0].mxu0
        %v2455 = vadd.f32 %v2382, %v2454
        %v2456 = vpop.f32.mrb[0].mxu0
        %2457 = vdwg.mxu0
        %v2460 = vunpack.c.l.s4 1966171168
        %v2461 = vunpack.c.0.s8 %v2460
        %v2462 = vlaneseq
        %v2463 = vshrl.u32 %v2462, 7
        %v2464 = vsub.s32 %v2461, %v2463
        %v2465 = vrot.slane %v2455, %v2464
        %v2466 = vcombine.high %v2465, %v2465
        %v2468 = vunpack.c.l.s4 1966171168
        %v2469 = vunpack.c.0.s8 %v2468
        %v2470 = vlaneseq
        %v2471 = vshrl.u32 %v2470, 7
        %v2472 = vsub.s32 %v2469, %v2471
        %v2473 = vrot.slane %v2465, %v2472
        %v2475 = vunpack.c.l.s4 1966171168
        %v2476 = vunpack.c.0.s8 %v2475
        %v2477 = vlaneseq
        %v2478 = vshrl.u32 %v2477, 7
        %v2479 = vsub.s32 %v2476, %v2478
        %v2480 = vrot.slane %v2466, %v2479
        %v2481 = vcombine.high %v2473, %v2473
        %v2482 = vcombine.high %v2480, %v2480
        %2487 = vst.msk [vmem:[%s190 + $0x3] sm:$0x1] %vm770, %v2473
        %2488 = vst.msk [vmem:[%s190 + $0xb] sm:$0x1] %vm770, %v2480
        %2489 = vst.msk [vmem:[%s190 + $0x13] sm:$0x1] %vm770, %v2481
        %2490 = vst.msk [vmem:[%s190 + $0x1b] sm:$0x1] %vm770, %v2482
        %v2491 = vld [vmem:[%s157 + $0xc] sm:$0x7]
        %v2492 = vld [vmem:[%s157 + $0x1c] sm:$0x7]
        %v2493 = vld [vmem:[%s157 + $0x2c] sm:$0x7]
        %v2494 = vld [vmem:[%s157 + $0x3c] sm:$0x7]
        %v2499 = vrot.slane %v2491, 1
        %v2500 = vrot.slane %v2492, 1
        %v2501 = vrot.slane %v2493, 1
        %v2502 = vrot.slane %v2494, 1
        %v2507 = vmax.f32 %v2491, %v2499
        %v2508 = vmax.f32 %v2492, %v2500
        %v2509 = vmax.f32 %v2493, %v2501
        %v2510 = vmax.f32 %v2494, %v2502
        %v2511 = vrot.slane %v2491, 2
        %v2512 = vrot.slane %v2492, 2
        %v2513 = vrot.slane %v2493, 2
        %v2514 = vrot.slane %v2494, 2
        %v2519 = vmax.f32 %v2507, %v2511
        %v2520 = vmax.f32 %v2508, %v2512
        %v2521 = vmax.f32 %v2509, %v2513
        %v2522 = vmax.f32 %v2510, %v2514
        %2527 = vrot.lane.b32.xlu0 %v2519, 127
        %v2528 = vpop.permute.xlu0 %2527
        %2529 = vrot.lane.b32.xlu0 %v2520, 127
        %v2530 = vpop.permute.xlu0 %2529
        %2531 = vrot.lane.b32.xlu0 %v2521, 127
        %v2532 = vpop.permute.xlu0 %2531
        %2533 = vrot.lane.b32.xlu0 %v2522, 127
        %v2534 = vpop.permute.xlu0 %2533
        %v2539 = vmax.f32 %v2519, %v2528
        %v2540 = vmax.f32 %v2520, %v2530
        %v2541 = vmax.f32 %v2521, %v2532
        %v2542 = vmax.f32 %v2522, %v2534
        %2543 = vrot.lane.b32.xlu0 %v2519, 126
        %v2544 = vpop.permute.xlu0 %2543
        %2545 = vrot.lane.b32.xlu0 %v2520, 126
        %v2546 = vpop.permute.xlu0 %2545
        %2547 = vrot.lane.b32.xlu0 %v2521, 126
        %v2548 = vpop.permute.xlu0 %2547
        %2549 = vrot.lane.b32.xlu0 %v2522, 126
        %v2550 = vpop.permute.xlu0 %2549
        %v2555 = vmax.f32 %v2539, %v2544
        %v2556 = vmax.f32 %v2540, %v2546
        %v2557 = vmax.f32 %v2541, %v2548
        %v2558 = vmax.f32 %v2542, %v2550
        %v2563 = vrot.slane %v2556, 7
        %v2564 = vsel %vm267, %v2563, %v2555
        %v2565 = vrot.slane %v2557, 6
        %v2566 = vsel %vm270, %v2565, %v2564
        %v2567 = vrot.slane %v2558, 5
        %v2568 = vsel %vm273, %v2567, %v2566
        %v2569 = vsel %vm275, %v2568, 0
        %2571 = vmatprep.subr.mxu0 0.0
        %v2572 = vand.u32 %v192, 4294901760
        %2573 = vmatpush1.msra.mxu0 %v2572
        %2574 = vmatprep.subr.mxu0 0.0
        %v2575 = vand.u32 %v280, 4294901760
        %2576 = vmatpush1.msra.mxu0 %v2575
        %2577 = vmatprep.subr.mxu0 0.0
        %2578 = vmatpush1.msra.mxu0 0.0
        %2579 = vmatprep.subr.mxu0 0.0
        %2580 = vmatpush1.msra.mxu0 0.0
        %2581 = vmatprep.subr.mxu0 0.0
        %2582 = vmatpush1.msra.mxu0 0.0
        %2583 = vmatprep.subr.mxu0 0.0
        %2584 = vmatpush1.msra.mxu0 0.0
        %2585 = vmatprep.subr.mxu0 0.0
        %2586 = vmatpush1.msra.mxu0 0.0
        %2587 = vmatprep.subr.mxu0 0.0
        %2588 = vmatpush1.msra.mxu0 0.0
        %2589 = vmatprep.subr.mxu0 0.0
        %2590 = vmatpush1.msra.mxu0 0.0
        %2591 = vmatprep.subr.mxu0 0.0
        %2592 = vmatpush1.msra.mxu0 0.0
        %2593 = vmatprep.subr.mxu0 0.0
        %2594 = vmatpush1.msra.mxu0 0.0
        %2595 = vmatprep.subr.mxu0 0.0
        %2596 = vmatpush1.msra.mxu0 0.0
        %2597 = vmatprep.subr.mxu0 0.0
        %2598 = vmatpush1.msra.mxu0 0.0
        %2599 = vmatprep.subr.mxu0 0.0
        %2600 = vmatpush1.msra.mxu0 0.0
        %2601 = vmatprep.subr.mxu0 0.0
        %2602 = vmatpush1.msra.mxu0 0.0
        %2603 = vmatprep.subr.mxu0 0.0
        %2604 = vmatpush1.msra.mxu0 0.0
        %2605 = vmatprep.subr.mxu0 0.0
        %2606 = vmatpush1.msra.mxu0 0.0
        %2607 = vmatprep.subr.mxu0 0.0
        %2608 = vmatpush1.msra.mxu0 0.0
        %2609 = vmatprep.subr.mxu0 0.0
        %2610 = vmatpush1.msra.mxu0 0.0
        %2611 = vmatprep.subr.mxu0 0.0
        %2612 = vmatpush1.msra.mxu0 0.0
        %2613 = vmatprep.subr.mxu0 0.0
        %2614 = vmatpush1.msra.mxu0 0.0
        %2615 = vmatprep.subr.mxu0 0.0
        %2616 = vmatpush1.msra.mxu0 0.0
        %2617 = vmatprep.subr.mxu0 0.0
        %2618 = vmatpush1.msra.mxu0 0.0
        %2619 = vmatprep.subr.mxu0 0.0
        %2620 = vmatpush1.msra.mxu0 0.0
        %2621 = vmatprep.subr.mxu0 0.0
        %2622 = vmatpush1.msra.mxu0 0.0
        %2623 = vmatprep.subr.mxu0 0.0
        %2624 = vmatpush1.msra.mxu0 0.0
        %2625 = vmatprep.subr.mxu0 0.0
        %2626 = vmatpush1.msra.mxu0 0.0
        %2627 = vmatprep.subr.mxu0 0.0
        %2628 = vmatpush1.msra.mxu0 0.0
        %2629 = vmatprep.subr.mxu0 0.0
        %2630 = vmatpush1.msra.mxu0 0.0
        %2631 = vmatprep.subr.mxu0 0.0
        %2632 = vmatpush1.msra.mxu0 0.0
        %2633 = vmatprep.subr.mxu0 0.0
        %2634 = vmatpush1.msra.mxu0 0.0
        %2635 = vmatprep.subr.mxu0 0.0
        %2636 = vmatpush1.msra.mxu0 0.0
        %2637 = vmatprep.mubr.f32.mxu0 0.0
        %v2638 = vand.u32 %v2569, 4294901760
        %v2639 = vsub.f32 %v2569, %v2638
        %v2640 = vand.u32 %v2639, 4294901760
        %v2641 = vsub.f32 %v2639, %v2640
        %v2642 = vand.u32 %v2641, 4294901760
        %2643 = vmatmul.mubr.f32.gmra.mrb[0].mxu0 %v2642
        %v2644 = vpop.f32.mrb[0].mxu0
        %v2645 = vadd.f32 0.0, %v2644
        %v2646 = vpop.f32.mrb[0].mxu0
        %2647 = vdwg.mxu0
        %2648 = vmatprep.subr.mxu0 0.0
        %v2649 = vand.u32 %v192, 4294901760
        %v2650 = vsub.f32 %v192, %v2649
        %v2651 = vand.u32 %v2650, 4294901760
        %v2652 = vsub.f32 %v2650, %v2651
        %v2653 = vand.u32 %v2652, 4294901760
        %2654 = vmatpush1.msra.mxu0 %v2653
        %2655 = vmatprep.subr.mxu0 0.0
        %v2656 = vand.u32 %v280, 4294901760
        %v2657 = vsub.f32 %v280, %v2656
        %v2658 = vand.u32 %v2657, 4294901760
        %v2659 = vsub.f32 %v2657, %v2658
        %v2660 = vand.u32 %v2659, 4294901760
        %2661 = vmatpush1.msra.mxu0 %v2660
        %2662 = vmatprep.subr.mxu0 0.0
        %2663 = vmatpush1.msra.mxu0 0.0
        %2664 = vmatprep.subr.mxu0 0.0
        %2665 = vmatpush1.msra.mxu0 0.0
        %2666 = vmatprep.subr.mxu0 0.0
        %2667 = vmatpush1.msra.mxu0 0.0
        %2668 = vmatprep.subr.mxu0 0.0
        %2669 = vmatpush1.msra.mxu0 0.0
        %2670 = vmatprep.subr.mxu0 0.0
        %2671 = vmatpush1.msra.mxu0 0.0
        %2672 = vmatprep.subr.mxu0 0.0
        %2673 = vmatpush1.msra.mxu0 0.0
        %2674 = vmatprep.subr.mxu0 0.0
        %2675 = vmatpush1.msra.mxu0 0.0
        %2676 = vmatprep.subr.mxu0 0.0
        %2677 = vmatpush1.msra.mxu0 0.0
        %2678 = vmatprep.subr.mxu0 0.0
        %2679 = vmatpush1.msra.mxu0 0.0
        %2680 = vmatprep.subr.mxu0 0.0
        %2681 = vmatpush1.msra.mxu0 0.0
        %2682 = vmatprep.subr.mxu0 0.0
        %2683 = vmatpush1.msra.mxu0 0.0
        %2684 = vmatprep.subr.mxu0 0.0
        %2685 = vmatpush1.msra.mxu0 0.0
        %2686 = vmatprep.subr.mxu0 0.0
        %2687 = vmatpush1.msra.mxu0 0.0
        %2688 = vmatprep.subr.mxu0 0.0
        %2689 = vmatpush1.msra.mxu0 0.0
        %2690 = vmatprep.subr.mxu0 0.0
        %2691 = vmatpush1.msra.mxu0 0.0
        %2692 = vmatprep.subr.mxu0 0.0
        %2693 = vmatpush1.msra.mxu0 0.0
        %2694 = vmatprep.subr.mxu0 0.0
        %2695 = vmatpush1.msra.mxu0 0.0
        %2696 = vmatprep.subr.mxu0 0.0
        %2697 = vmatpush1.msra.mxu0 0.0
        %2698 = vmatprep.subr.mxu0 0.0
        %2699 = vmatpush1.msra.mxu0 0.0
        %2700 = vmatprep.subr.mxu0 0.0
        %2701 = vmatpush1.msra.mxu0 0.0
        %2702 = vmatprep.subr.mxu0 0.0
        %2703 = vmatpush1.msra.mxu0 0.0
        %2704 = vmatprep.subr.mxu0 0.0
        %2705 = vmatpush1.msra.mxu0 0.0
        %2706 = vmatprep.subr.mxu0 0.0
        %2707 = vmatpush1.msra.mxu0 0.0
        %2708 = vmatprep.subr.mxu0 0.0
        %2709 = vmatpush1.msra.mxu0 0.0
        %2710 = vmatprep.subr.mxu0 0.0
        %2711 = vmatpush1.msra.mxu0 0.0
        %2712 = vmatprep.subr.mxu0 0.0
        %2713 = vmatpush1.msra.mxu0 0.0
        %2714 = vmatprep.subr.mxu0 0.0
        %2715 = vmatpush1.msra.mxu0 0.0
        %2716 = vmatprep.subr.mxu0 0.0
        %2717 = vmatpush1.msra.mxu0 0.0
        %2718 = vmatprep.subr.mxu0 0.0
        %2719 = vmatpush1.msra.mxu0 0.0
        %2720 = vmatprep.subr.mxu0 0.0
        %2721 = vmatpush1.msra.mxu0 0.0
        %2722 = vmatprep.mubr.f32.mxu0 0.0
        %v2723 = vand.u32 %v2569, 4294901760
        %2724 = vmatmul.mubr.f32.gmra.mrb[0].mxu0 %v2723
        %v2725 = vpop.f32.mrb[0].mxu0
        %v2726 = vadd.f32 %v2645, %v2725
        %v2727 = vpop.f32.mrb[0].mxu0
        %2728 = vdwg.mxu0
        %2729 = vmatprep.subr.mxu0 0.0
        %v2730 = vand.u32 %v192, 4294901760
        %v2731 = vsub.f32 %v192, %v2730
        %2732 = vmatpush1.msra.mxu0 %v2731
        %2733 = vmatprep.subr.mxu0 0.0
        %v2734 = vand.u32 %v280, 4294901760
        %v2735 = vsub.f32 %v280, %v2734
        %2736 = vmatpush1.msra.mxu0 %v2735
        %2737 = vmatprep.subr.mxu0 0.0
        %2738 = vmatpush1.msra.mxu0 0.0
        %2739 = vmatprep.subr.mxu0 0.0
        %2740 = vmatpush1.msra.mxu0 0.0
        %2741 = vmatprep.subr.mxu0 0.0
        %2742 = vmatpush1.msra.mxu0 0.0
        %2743 = vmatprep.subr.mxu0 0.0
        %2744 = vmatpush1.msra.mxu0 0.0
        %2745 = vmatprep.subr.mxu0 0.0
        %2746 = vmatpush1.msra.mxu0 0.0
        %2747 = vmatprep.subr.mxu0 0.0
        %2748 = vmatpush1.msra.mxu0 0.0
        %2749 = vmatprep.subr.mxu0 0.0
        %2750 = vmatpush1.msra.mxu0 0.0
        %2751 = vmatprep.subr.mxu0 0.0
        %2752 = vmatpush1.msra.mxu0 0.0
        %2753 = vmatprep.subr.mxu0 0.0
        %2754 = vmatpush1.msra.mxu0 0.0
        %2755 = vmatprep.subr.mxu0 0.0
        %2756 = vmatpush1.msra.mxu0 0.0
        %2757 = vmatprep.subr.mxu0 0.0
        %2758 = vmatpush1.msra.mxu0 0.0
        %2759 = vmatprep.subr.mxu0 0.0
        %2760 = vmatpush1.msra.mxu0 0.0
        %2761 = vmatprep.subr.mxu0 0.0
        %2762 = vmatpush1.msra.mxu0 0.0
        %2763 = vmatprep.subr.mxu0 0.0
        %2764 = vmatpush1.msra.mxu0 0.0
        %2765 = vmatprep.subr.mxu0 0.0
        %2766 = vmatpush1.msra.mxu0 0.0
        %2767 = vmatprep.subr.mxu0 0.0
        %2768 = vmatpush1.msra.mxu0 0.0
        %2769 = vmatprep.subr.mxu0 0.0
        %2770 = vmatpush1.msra.mxu0 0.0
        %2771 = vmatprep.subr.mxu0 0.0
        %2772 = vmatpush1.msra.mxu0 0.0
        %2773 = vmatprep.subr.mxu0 0.0
        %2774 = vmatpush1.msra.mxu0 0.0
        %2775 = vmatprep.subr.mxu0 0.0
        %2776 = vmatpush1.msra.mxu0 0.0
        %2777 = vmatprep.subr.mxu0 0.0
        %2778 = vmatpush1.msra.mxu0 0.0
        %2779 = vmatprep.subr.mxu0 0.0
        %2780 = vmatpush1.msra.mxu0 0.0
        %2781 = vmatprep.subr.mxu0 0.0
        %2782 = vmatpush1.msra.mxu0 0.0
        %2783 = vmatprep.subr.mxu0 0.0
        %2784 = vmatpush1.msra.mxu0 0.0
        %2785 = vmatprep.subr.mxu0 0.0
        %2786 = vmatpush1.msra.mxu0 0.0
        %2787 = vmatprep.subr.mxu0 0.0
        %2788 = vmatpush1.msra.mxu0 0.0
        %2789 = vmatprep.subr.mxu0 0.0
        %2790 = vmatpush1.msra.mxu0 0.0
        %2791 = vmatprep.subr.mxu0 0.0
        %2792 = vmatpush1.msra.mxu0 0.0
        %2793 = vmatprep.subr.mxu0 0.0
        %2794 = vmatpush1.msra.mxu0 0.0
        %2795 = vmatprep.subr.mxu0 0.0
        %2796 = vmatpush1.msra.mxu0 0.0
        %2797 = vmatprep.mubr.f32.mxu0 0.0
        %v2798 = vand.u32 %v2569, 4294901760
        %v2799 = vsub.f32 %v2569, %v2798
        %2800 = vmatmul.mubr.f32.gmra.mrb[0].mxu0 %v2799
        %v2801 = vpop.f32.mrb[0].mxu0
        %v2802 = vadd.f32 %v2726, %v2801
        %v2803 = vpop.f32.mrb[0].mxu0
        %2804 = vdwg.mxu0
        %2805 = vmatprep.subr.mxu0 0.0
        %v2806 = vand.u32 %v192, 4294901760
        %2807 = vmatpush1.msra.mxu0 %v2806
        %2808 = vmatprep.subr.mxu0 0.0
        %v2809 = vand.u32 %v280, 4294901760
        %2810 = vmatpush1.msra.mxu0 %v2809
        %2811 = vmatprep.subr.mxu0 0.0
        %2812 = vmatpush1.msra.mxu0 0.0
        %2813 = vmatprep.subr.mxu0 0.0
        %2814 = vmatpush1.msra.mxu0 0.0
        %2815 = vmatprep.subr.mxu0 0.0
        %2816 = vmatpush1.msra.mxu0 0.0
        %2817 = vmatprep.subr.mxu0 0.0
        %2818 = vmatpush1.msra.mxu0 0.0
        %2819 = vmatprep.subr.mxu0 0.0
        %2820 = vmatpush1.msra.mxu0 0.0
        %2821 = vmatprep.subr.mxu0 0.0
        %2822 = vmatpush1.msra.mxu0 0.0
        %2823 = vmatprep.subr.mxu0 0.0
        %2824 = vmatpush1.msra.mxu0 0.0
        %2825 = vmatprep.subr.mxu0 0.0
        %2826 = vmatpush1.msra.mxu0 0.0
        %2827 = vmatprep.subr.mxu0 0.0
        %2828 = vmatpush1.msra.mxu0 0.0
        %2829 = vmatprep.subr.mxu0 0.0
        %2830 = vmatpush1.msra.mxu0 0.0
        %2831 = vmatprep.subr.mxu0 0.0
        %2832 = vmatpush1.msra.mxu0 0.0
        %2833 = vmatprep.subr.mxu0 0.0
        %2834 = vmatpush1.msra.mxu0 0.0
        %2835 = vmatprep.subr.mxu0 0.0
        %2836 = vmatpush1.msra.mxu0 0.0
        %2837 = vmatprep.subr.mxu0 0.0
        %2838 = vmatpush1.msra.mxu0 0.0
        %2839 = vmatprep.subr.mxu0 0.0
        %2840 = vmatpush1.msra.mxu0 0.0
        %2841 = vmatprep.subr.mxu0 0.0
        %2842 = vmatpush1.msra.mxu0 0.0
        %2843 = vmatprep.subr.mxu0 0.0
        %2844 = vmatpush1.msra.mxu0 0.0
        %2845 = vmatprep.subr.mxu0 0.0
        %2846 = vmatpush1.msra.mxu0 0.0
        %2847 = vmatprep.subr.mxu0 0.0
        %2848 = vmatpush1.msra.mxu0 0.0
        %2849 = vmatprep.subr.mxu0 0.0
        %2850 = vmatpush1.msra.mxu0 0.0
        %2851 = vmatprep.subr.mxu0 0.0
        %2852 = vmatpush1.msra.mxu0 0.0
        %2853 = vmatprep.subr.mxu0 0.0
        %2854 = vmatpush1.msra.mxu0 0.0
        %2855 = vmatprep.subr.mxu0 0.0
        %2856 = vmatpush1.msra.mxu0 0.0
        %2857 = vmatprep.subr.mxu0 0.0
        %2858 = vmatpush1.msra.mxu0 0.0
        %2859 = vmatprep.subr.mxu0 0.0
        %2860 = vmatpush1.msra.mxu0 0.0
        %2861 = vmatprep.subr.mxu0 0.0
        %2862 = vmatpush1.msra.mxu0 0.0
        %2863 = vmatprep.subr.mxu0 0.0
        %2864 = vmatpush1.msra.mxu0 0.0
        %2865 = vmatprep.subr.mxu0 0.0
        %2866 = vmatpush1.msra.mxu0 0.0
        %2867 = vmatprep.subr.mxu0 0.0
        %2868 = vmatpush1.msra.mxu0 0.0
        %2869 = vmatprep.subr.mxu0 0.0
        %2870 = vmatpush1.msra.mxu0 0.0
        %2871 = vmatprep.mubr.f32.mxu0 0.0
        %v2872 = vand.u32 %v2569, 4294901760
        %v2873 = vsub.f32 %v2569, %v2872
        %v2874 = vand.u32 %v2873, 4294901760
        %2875 = vmatmul.mubr.f32.gmra.mrb[0].mxu0 %v2874
        %v2876 = vpop.f32.mrb[0].mxu0
        %v2877 = vadd.f32 %v2802, %v2876
        %v2878 = vpop.f32.mrb[0].mxu0
        %2879 = vdwg.mxu0
        %2880 = vmatprep.subr.mxu0 0.0
        %v2881 = vand.u32 %v192, 4294901760
        %v2882 = vsub.f32 %v192, %v2881
        %v2883 = vand.u32 %v2882, 4294901760
        %2884 = vmatpush1.msra.mxu0 %v2883
        %2885 = vmatprep.subr.mxu0 0.0
        %v2886 = vand.u32 %v280, 4294901760
        %v2887 = vsub.f32 %v280, %v2886
        %v2888 = vand.u32 %v2887, 4294901760
        %2889 = vmatpush1.msra.mxu0 %v2888
        %2890 = vmatprep.subr.mxu0 0.0
        %2891 = vmatpush1.msra.mxu0 0.0
        %2892 = vmatprep.subr.mxu0 0.0
        %2893 = vmatpush1.msra.mxu0 0.0
        %2894 = vmatprep.subr.mxu0 0.0
        %2895 = vmatpush1.msra.mxu0 0.0
        %2896 = vmatprep.subr.mxu0 0.0
        %2897 = vmatpush1.msra.mxu0 0.0
        %2898 = vmatprep.subr.mxu0 0.0
        %2899 = vmatpush1.msra.mxu0 0.0
        %2900 = vmatprep.subr.mxu0 0.0
        %2901 = vmatpush1.msra.mxu0 0.0
        %2902 = vmatprep.subr.mxu0 0.0
        %2903 = vmatpush1.msra.mxu0 0.0
        %2904 = vmatprep.subr.mxu0 0.0
        %2905 = vmatpush1.msra.mxu0 0.0
        %2906 = vmatprep.subr.mxu0 0.0
        %2907 = vmatpush1.msra.mxu0 0.0
        %2908 = vmatprep.subr.mxu0 0.0
        %2909 = vmatpush1.msra.mxu0 0.0
        %2910 = vmatprep.subr.mxu0 0.0
        %2911 = vmatpush1.msra.mxu0 0.0
        %2912 = vmatprep.subr.mxu0 0.0
        %2913 = vmatpush1.msra.mxu0 0.0
        %2914 = vmatprep.subr.mxu0 0.0
        %2915 = vmatpush1.msra.mxu0 0.0
        %2916 = vmatprep.subr.mxu0 0.0
        %2917 = vmatpush1.msra.mxu0 0.0
        %2918 = vmatprep.subr.mxu0 0.0
        %2919 = vmatpush1.msra.mxu0 0.0
        %2920 = vmatprep.subr.mxu0 0.0
        %2921 = vmatpush1.msra.mxu0 0.0
        %2922 = vmatprep.subr.mxu0 0.0
        %2923 = vmatpush1.msra.mxu0 0.0
        %2924 = vmatprep.subr.mxu0 0.0
        %2925 = vmatpush1.msra.mxu0 0.0
        %2926 = vmatprep.subr.mxu0 0.0
        %2927 = vmatpush1.msra.mxu0 0.0
        %2928 = vmatprep.subr.mxu0 0.0
        %2929 = vmatpush1.msra.mxu0 0.0
        %2930 = vmatprep.subr.mxu0 0.0
        %2931 = vmatpush1.msra.mxu0 0.0
        %2932 = vmatprep.subr.mxu0 0.0
        %2933 = vmatpush1.msra.mxu0 0.0
        %2934 = vmatprep.subr.mxu0 0.0
        %2935 = vmatpush1.msra.mxu0 0.0
        %2936 = vmatprep.subr.mxu0 0.0
        %2937 = vmatpush1.msra.mxu0 0.0
        %2938 = vmatprep.subr.mxu0 0.0
        %2939 = vmatpush1.msra.mxu0 0.0
        %2940 = vmatprep.subr.mxu0 0.0
        %2941 = vmatpush1.msra.mxu0 0.0
        %2942 = vmatprep.subr.mxu0 0.0
        %2943 = vmatpush1.msra.mxu0 0.0
        %2944 = vmatprep.subr.mxu0 0.0
        %2945 = vmatpush1.msra.mxu0 0.0
        %2946 = vmatprep.subr.mxu0 0.0
        %2947 = vmatpush1.msra.mxu0 0.0
        %2948 = vmatprep.subr.mxu0 0.0
        %2949 = vmatpush1.msra.mxu0 0.0
        %2950 = vmatprep.mubr.f32.mxu0 0.0
        %v2951 = vand.u32 %v2569, 4294901760
        %2952 = vmatmul.mubr.f32.gmra.mrb[0].mxu0 %v2951
        %v2953 = vpop.f32.mrb[0].mxu0
        %v2954 = vadd.f32 %v2877, %v2953
        %v2955 = vpop.f32.mrb[0].mxu0
        %2956 = vdwg.mxu0
        %2957 = vmatprep.subr.mxu0 0.0
        %v2958 = vand.u32 %v192, 4294901760
        %2959 = vmatpush1.msra.mxu0 %v2958
        %2960 = vmatprep.subr.mxu0 0.0
        %v2961 = vand.u32 %v280, 4294901760
        %2962 = vmatpush1.msra.mxu0 %v2961
        %2963 = vmatprep.subr.mxu0 0.0
        %2964 = vmatpush1.msra.mxu0 0.0
        %2965 = vmatprep.subr.mxu0 0.0
        %2966 = vmatpush1.msra.mxu0 0.0
        %2967 = vmatprep.subr.mxu0 0.0
        %2968 = vmatpush1.msra.mxu0 0.0
        %2969 = vmatprep.subr.mxu0 0.0
        %2970 = vmatpush1.msra.mxu0 0.0
        %2971 = vmatprep.subr.mxu0 0.0
        %2972 = vmatpush1.msra.mxu0 0.0
        %2973 = vmatprep.subr.mxu0 0.0
        %2974 = vmatpush1.msra.mxu0 0.0
        %2975 = vmatprep.subr.mxu0 0.0
        %2976 = vmatpush1.msra.mxu0 0.0
        %2977 = vmatprep.subr.mxu0 0.0
        %2978 = vmatpush1.msra.mxu0 0.0
        %2979 = vmatprep.subr.mxu0 0.0
        %2980 = vmatpush1.msra.mxu0 0.0
        %2981 = vmatprep.subr.mxu0 0.0
        %2982 = vmatpush1.msra.mxu0 0.0
        %2983 = vmatprep.subr.mxu0 0.0
        %2984 = vmatpush1.msra.mxu0 0.0
        %2985 = vmatprep.subr.mxu0 0.0
        %2986 = vmatpush1.msra.mxu0 0.0
        %2987 = vmatprep.subr.mxu0 0.0
        %2988 = vmatpush1.msra.mxu0 0.0
        %2989 = vmatprep.subr.mxu0 0.0
        %2990 = vmatpush1.msra.mxu0 0.0
        %2991 = vmatprep.subr.mxu0 0.0
        %2992 = vmatpush1.msra.mxu0 0.0
        %2993 = vmatprep.subr.mxu0 0.0
        %2994 = vmatpush1.msra.mxu0 0.0
        %2995 = vmatprep.subr.mxu0 0.0
        %2996 = vmatpush1.msra.mxu0 0.0
        %2997 = vmatprep.subr.mxu0 0.0
        %2998 = vmatpush1.msra.mxu0 0.0
        %2999 = vmatprep.subr.mxu0 0.0
        %3000 = vmatpush1.msra.mxu0 0.0
        %3001 = vmatprep.subr.mxu0 0.0
        %3002 = vmatpush1.msra.mxu0 0.0
        %3003 = vmatprep.subr.mxu0 0.0
        %3004 = vmatpush1.msra.mxu0 0.0
        %3005 = vmatprep.subr.mxu0 0.0
        %3006 = vmatpush1.msra.mxu0 0.0
        %3007 = vmatprep.subr.mxu0 0.0
        %3008 = vmatpush1.msra.mxu0 0.0
        %3009 = vmatprep.subr.mxu0 0.0
        %3010 = vmatpush1.msra.mxu0 0.0
        %3011 = vmatprep.subr.mxu0 0.0
        %3012 = vmatpush1.msra.mxu0 0.0
        %3013 = vmatprep.subr.mxu0 0.0
        %3014 = vmatpush1.msra.mxu0 0.0
        %3015 = vmatprep.subr.mxu0 0.0
        %3016 = vmatpush1.msra.mxu0 0.0
        %3017 = vmatprep.subr.mxu0 0.0
        %3018 = vmatpush1.msra.mxu0 0.0
        %3019 = vmatprep.subr.mxu0 0.0
        %3020 = vmatpush1.msra.mxu0 0.0
        %3021 = vmatprep.subr.mxu0 0.0
        %3022 = vmatpush1.msra.mxu0 0.0
        %3023 = vmatprep.mubr.f32.mxu0 0.0
        %v3024 = vand.u32 %v2569, 4294901760
        %3025 = vmatmul.mubr.f32.gmra.mrb[0].mxu0 %v3024
        %v3026 = vpop.f32.mrb[0].mxu0
        %v3027 = vadd.f32 %v2954, %v3026
        %v3028 = vpop.f32.mrb[0].mxu0
        %3029 = vdwg.mxu0
        %v3032 = vunpack.c.l.s4 1966171168
        %v3033 = vunpack.c.0.s8 %v3032
        %v3034 = vlaneseq
        %v3035 = vshrl.u32 %v3034, 7
        %v3036 = vsub.s32 %v3033, %v3035
        %v3037 = vrot.slane %v3027, %v3036
        %v3038 = vcombine.high %v3037, %v3037
        %v3040 = vunpack.c.l.s4 1966171168
        %v3041 = vunpack.c.0.s8 %v3040
        %v3042 = vlaneseq
        %v3043 = vshrl.u32 %v3042, 7
        %v3044 = vsub.s32 %v3041, %v3043
        %v3045 = vrot.slane %v3037, %v3044
        %v3047 = vunpack.c.l.s4 1966171168
        %v3048 = vunpack.c.0.s8 %v3047
        %v3049 = vlaneseq
        %v3050 = vshrl.u32 %v3049, 7
        %v3051 = vsub.s32 %v3048, %v3050
        %v3052 = vrot.slane %v3038, %v3051
        %v3053 = vcombine.high %v3045, %v3045
        %v3054 = vcombine.high %v3052, %v3052
        %3059 = vst.msk [vmem:[%s190 + $0x4] sm:$0x1] %vm770, %v3045
        %3060 = vst.msk [vmem:[%s190 + $0xc] sm:$0x1] %vm770, %v3052
        %3061 = vst.msk [vmem:[%s190 + $0x14] sm:$0x1] %vm770, %v3053
        %3062 = vst.msk [vmem:[%s190 + $0x1c] sm:$0x1] %vm770, %v3054
        %s3063 = smul.u32 4, %s20
        %p3064 = scmp.lt.s32.totalorder %s3063, 7
        %s3065 = scalar_select %p3064, %s3063, 7
        %p3066 = scmp.lt.s32.totalorder %s21, 0
        %s3067 = scalar_select %p3066, %s21, 0
        %s3068 = sadd.s32 %s3067, %s3065
        %s3069 = smul.addr %s3068, 8
        %s3070 = scalar_lea.vmem %s2, %s3069
        // Predicated region
        $region33: #{tpu_custom_call.1} parent=27 // pred_check
          %p3071 = pneg %p97
        $region34: #{tpu_custom_call.1} parent=27 // pred_check_branch
          %3073 = sbr.rel (%p3071) target = $region36
        $region35: #{tpu_custom_call.1} parent=27 // pred_region
          %s3074 = smul.u32 4, %s20
        $region36: #{tpu_custom_call.1} parent=27 // pred_fallthru
          _
      $region28: #{tpu_custom_call.1} parent=5 // pred_fallthru
        _
      %p3075 = scmp.le.s32.totalorder 2, %s11
      // Predicated region
      $region37: #{tpu_custom_call.1} parent=5 // pred_check
        %p3076 = pneg %p3075
      $region38: #{tpu_custom_call.1} parent=5 // pred_check_branch
        %3078 = sbr.rel (%p3076) target = $region40
      $region39: #{tpu_custom_call.1} parent=5 // pred_region
        %s3079 = ssub.s32 %s11, 2
        // Predicated region
        $region41: #{tpu_custom_call.1} parent=39 // pred_check
          %p3080 = pneg %p103
        $region42: #{tpu_custom_call.1} parent=39 // pred_check_branch
          %3082 = sbr.rel (%p3080) target = $region44
        $region43: #{tpu_custom_call.1} parent=39 // pred_region
          %s3083 = smul.u32 4, %s22
          %p3084 = scmp.lt.s32.totalorder %s3083, 7
          %s3085 = scalar_select %p3084, %s3083, 7
          %p3086 = scmp.lt.s32.totalorder %s23, 0
          %s3087 = scalar_select %p3086, %s23, 0
          %s3088 = sadd.s32 %s3087, %s3085
          %s3089 = smul.addr %s3088, 8
          %s3090 = scalar_lea.vmem %s2, %s3089
        $region44: #{tpu_custom_call.1} parent=39 // pred_fallthru
          _
      $region40: #{tpu_custom_call.1} parent=5 // pred_fallthru
        _
    $region6: #{tpu_custom_call.1} parent=1 // loop_footer
      %s15 = sadd.s32 1, %s11
    $region7: #{tpu_custom_call.1} parent=1 // loop_footer_branch
      %10 = sbr.rel target = $region3
    $region8: #{tpu_custom_call.1} parent=1 // loop_exit
      _
    %3091 = vsyncpa [#allocation3], 1
    %s3092 = scalar_lea.sflag [#allocation3], 1
    %3093 = vsyncpa %s3092, 1

</llo_original>
